<compile_context>
chip_gen: v6e
topology: v6e:2x2x1
jax: 0.10.0
libtpu: 0.0.40
codegen_flags: <defaults>
</compile_context>

<pallas_src>
import numpy as np
import jax
import jax.numpy as jnp
from jax.experimental import pallas as pl
from jax.experimental.pallas import tpu as pltpu


def _ceil_div(a, b):
    return -(-a // b)


def _num_tensorcores():
    """Best-effort TensorCore count per chip (v7x = 2, v5e/v6e = 1)."""
    try:
        kind = jax.devices()[0].device_kind.lower()
        if "v7" in kind or "7x" in kind:
            return 2
    except Exception:
        pass
    return 1


def make_coupling_kernel(num_classes, k_sort, c1, c2, reverse):
    K = num_classes

    def kernel(x1_ref, wT_ref, b_ref, x2_ref, out_ref):
        # Classes on sublanes, rows on lanes. Keep the class iota as a column
        # vector; compares against it lane-broadcast for free.
        kcol = jax.lax.broadcasted_iota(jnp.int32, (K, 1), 0)       # (K, 1)

        x1 = x1_ref[...]                                            # (c1, tm) int32
        # one-hot(x1) built in VMEM (never touches HBM): (c1*K, tm)
        onehot = jnp.concatenate(
            [(x1[cc:cc + 1, :] == kcol).astype(jnp.float32) for cc in range(c1)],
            axis=0)

        x2 = x2_ref[...]                                            # (c2, tm) int32

        for c in range(c2):                                         # c2 tiny & static
            # Per-channel logits: only (K, tm) live across the sort instead of
            # the full (c2*K, tm) block.
            p = jnp.dot(wT_ref[c * K:(c + 1) * K, :], onehot,
                        preferred_element_type=jnp.float32)
            p = p + b_ref[c * K:(c + 1) * K, :]
            # NOTE: a softmax head would be strictly monotone within the class
            # group, so it cannot change the selection order below.

            cls = x2[c:c + 1, :]                                    # (1, tm)
            pos = cls                                               # forward: track online
            max_idx_steps = []                                      # reverse: replay swaps

            # ---- k_sort-step partial selection sort (positions only) ----
            for i in range(k_sort):                                 # static, small
                masked = p if i == 0 else jnp.where(kcol >= i, p, -jnp.inf)
                mv = jnp.max(masked, axis=0, keepdims=True)         # (1, tm)
                # first index achieving the max (np.argmax semantics):
                max_idx = jnp.min(jnp.where(masked == mv, kcol, K),
                                  axis=0, keepdims=True)            # (1, tm)
                if i + 1 < k_sort:
                    # p[max_idx] = p[i]  (old p[i] stays in play for later steps)
                    p = jnp.where(kcol == max_idx, p[i:i + 1, :], p)
                if reverse:
                    max_idx_steps.append(max_idx)
                else:
                    # apply the swap of positions (i, max_idx) to the tracked
                    # position of cls in the evolving permutation
                    pos = jnp.where(pos == max_idx, i,
                                    jnp.where(pos == i, max_idx, pos))

            if reverse:
                # y = perm[cls]; perm = s_0 ∘ s_1 ∘ ... ∘ s_{k-1}
                # -> apply the recorded swaps to cls in reverse order.
                for i in reversed(range(k_sort)):
                    mi = max_idx_steps[i]
                    pos = jnp.where(pos == i, mi,
                                    jnp.where(pos == mi, i, pos))

            # lane-dense (multiple-of-128) row store, no concat temp
            out_ref[c:c + 1, :] = pos.astype(jnp.int32)

    return kernel


def coupling_forward(x, w, b, *, num_classes, k_sort, reverse=False, tm_max=512):
    """x: (B, C, H, W) int32 class indices in [0, num_classes)."""
    B, C, H, Wd = x.shape
    c1 = C - C // 2          # split_idx
    c2 = C - c1
    K = num_classes
    R = B * H * Wd

    # Generation-aware tiling: fewest grid steps possible (per-step overhead is
    # ~600 cycles), but an even multiple of the TensorCore count so v7x's two
    # cores get balanced work.  tm capped by vreg pressure, not VMEM.
    num_cores = _num_tensorcores()
    steps = _ceil_div(max(1, _ceil_div(R, tm_max)), num_cores) * num_cores
    tm = max(128, _ceil_div(_ceil_div(R, steps), 128) * 128)
    Rp = tm * steps

    x1 = x[:, :c1]
    x2 = x[:, c1:]

    # channels-first, rows-on-lanes layout: (c, B*H*W)
    x1t = jnp.transpose(x1, (1, 0, 2, 3)).reshape(c1, R).astype(jnp.int32)
    x2t = jnp.transpose(x2, (1, 0, 2, 3)).reshape(c2, R).astype(jnp.int32)
    if Rp != R:
        pad = Rp - R
        x1t = jnp.pad(x1t, ((0, 0), (0, pad)))   # class-0 rows, discarded later
        x2t = jnp.pad(x2t, ((0, 0), (0, pad)))

    wT = jnp.asarray(w, jnp.float32).T                      # (c2*K, c1*K)
    bT = jnp.asarray(b, jnp.float32).reshape(c2 * K, 1)     # (c2*K, 1)

    cost = pl.CostEstimate(
        flops=2 * Rp * (c1 * K) * (c2 * K),
        transcendentals=0,
        bytes_accessed=Rp * (c1 + 2 * c2) * 4 + (c2 * K) * (c1 * K + 1) * 4,
    )

    kernel = make_coupling_kernel(K, k_sort, c1, c2, reverse)
    y2t = pl.pallas_call(
        kernel,
        out_shape=jax.ShapeDtypeStruct((c2, Rp), jnp.int32),
        grid=(Rp // tm,),
        in_specs=[
            pl.BlockSpec((c1, tm), lambda i: (0, i)),          # x1 class ids
            pl.BlockSpec((c2 * K, c1 * K), lambda i: (0, 0)),  # conv weight (T)
            pl.BlockSpec((c2 * K, 1), lambda i: (0, 0)),       # conv bias (col)
            pl.BlockSpec((c2, tm), lambda i: (0, i)),          # x2 class ids
        ],
        out_specs=pl.BlockSpec((c2, tm), lambda i: (0, i)),    # lane-dense out
        compiler_params=pltpu.CompilerParams(
            dimension_semantics=("parallel",)),
        cost_estimate=cost,
    )(x1t, wT, bT, x2t)

    y2 = y2t[:, :R].reshape(c2, B, H, Wd)
    y2 = jnp.transpose(y2, (1, 0, 2, 3)).astype(x.dtype)
    return jnp.concatenate([x1, y2], axis=1)


# --------- pure NumPy reference mirroring the PyTorch code exactly ----------
def reference_forward(x, w, b, *, num_classes, k_sort, reverse=False):
    x = np.asarray(x)
    w = np.asarray(w, np.float32)
    b = np.asarray(b, np.float32)
    B, C, H, Wd = x.shape
    c1 = C - C // 2
    c2 = C - c1
    K = num_classes
    x1, x2 = x[:, :c1], x[:, c1:]

    x1t = np.transpose(x1, (0, 2, 3, 1))
    x1f = np.eye(K, dtype=np.float32)[x1t].reshape(B * H * Wd, c1 * K)
    logits = x1f @ w + b                    # synthetic NN output (scores)
    p = logits.reshape(-1, K).astype(np.float32).copy()
    cls = np.transpose(x2, (0, 2, 3, 1)).reshape(-1)

    N = p.shape[0]
    rows = np.arange(N)
    perm = np.tile(np.arange(K), (N, 1))
    for i in range(k_sort):
        max_idx = np.argmax(p[:, i:], axis=1) + i
        p[rows, max_idx] = p[rows, i]
        p_i = perm[rows, max_idx].copy()
        perm[rows, max_idx] = perm[rows, i]
        perm[rows, i] = p_i
    if reverse:
        inv = np.empty_like(perm)
        inv[rows[:, None], perm] = np.tile(np.arange(K), (N, 1))
        perm = inv
    y = np.argmax(perm == cls[:, None], axis=1)   # gather one-hot + argmax
    y2 = np.transpose(y.reshape(B, H, Wd, c2), (0, 3, 1, 2)).astype(x.dtype)
    return np.concatenate([x1, y2], axis=1)


if __name__ == "__main__":
    key = jax.random.PRNGKey(0)

    def run_case(case_key, B, C, H, W, num_classes, k_sort):
        c1 = C - C // 2
        c2 = C - c1
        kx, kw, kb = jax.random.split(case_key, 3)
        x = jax.random.randint(kx, (B, C, H, W), 0, num_classes, dtype=jnp.int32)
        # deterministic synthetic "NN" parameters (one-hot embedding + 1x1 conv)
        w = 0.5 * jax.random.normal(kw, (c1 * num_classes, c2 * num_classes),
                                    jnp.float32)
        b = 0.1 * jax.random.normal(kb, (1, c2 * num_classes), jnp.float32)

        y_fwd = coupling_forward(x, w, b, num_classes=num_classes,
                                 k_sort=k_sort, reverse=False)
        jax.block_until_ready(y_fwd)
        y_rev = coupling_forward(y_fwd, w, b, num_classes=num_classes,
                                 k_sort=k_sort, reverse=True)
        jax.block_until_ready(y_rev)

        ref_fwd = reference_forward(np.asarray(x), np.asarray(w), np.asarray(b),
                                    num_classes=num_classes, k_sort=k_sort,
                                    reverse=False)
        ref_rev = reference_forward(np.asarray(y_fwd), np.asarray(w),
                                    np.asarray(b), num_classes=num_classes,
                                    k_sort=k_sort, reverse=True)
        assert np.array_equal(np.asarray(y_fwd), ref_fwd), "forward mismatch"
        assert np.array_equal(np.asarray(y_rev), ref_rev), "reverse mismatch"
        assert np.array_equal(np.asarray(y_rev), np.asarray(x)), "not inverted"

    k1, k2 = jax.random.split(key)
    run_case(k1, B=2, C=4, H=16, W=16, num_classes=16, k_sort=4)  # main shape
    run_case(k2, B=1, C=3, H=10, W=10, num_classes=16, k_sort=3)  # padding/odd split
    print("KERNEL_OK")
</pallas_src>

<mosaic_0001>
module attributes {stable_mosaic.version = 11 : i64} {
  func.func @kernel(%arg0: i32, %arg1: memref<2x512xi32, #tpu.memory_space<vmem>>, %arg2: memref<32x32xf32, #tpu.memory_space<vmem>>, %arg3: memref<32x1xf32, #tpu.memory_space<vmem>>, %arg4: memref<2x512xi32, #tpu.memory_space<vmem>>, %arg5: memref<2x512xi32, #tpu.memory_space<vmem>>) attributes {dimension_semantics = [#tpu.dimension_semantics<parallel>], iteration_bounds = array<i64: 1>, scalar_prefetch = 0 : i64, scratch_operands = 0 : i64, tpu.core_type = #tpu.core_type<tc>, window_params = [{transform_indices = @transform_0, window_bounds = array<i64: 2, 512>}, {pipeline_mode = #tpu.pipeline_mode<synchronous>, transform_indices = @transform_1, window_bounds = array<i64: 32, 32>}, {pipeline_mode = #tpu.pipeline_mode<synchronous>, transform_indices = @transform_2, window_bounds = array<i64: 32, 1>}, {transform_indices = @transform_3, window_bounds = array<i64: 2, 512>}, {transform_indices = @transform_4, window_bounds = array<i64: 2, 512>}]} {
    %0 = tpu.iota {dimensions = array<i32: 0>} : vector<16x1xi32>
    %c0 = arith.constant 0 : index
    %c0_0 = arith.constant 0 : index
    %1 = vector.load %arg1[%c0, %c0_0] : memref<2x512xi32, #tpu.memory_space<vmem>>, vector<2x512xi32>
    %2 = vector.extract_strided_slice %1 {offsets = [0, 0], sizes = [1, 512], strides = [1, 1]} : vector<2x512xi32> to vector<1x512xi32>
    %3 = vector.broadcast %2 : vector<1x512xi32> to vector<16x512xi32>
    %4 = vector.broadcast %0 : vector<16x1xi32> to vector<16x512xi32>
    %5 = arith.cmpi eq, %3, %4 : vector<16x512xi32>
    %6 = arith.extui %5 : vector<16x512xi1> to vector<16x512xi32>
    %7 = arith.sitofp %6 : vector<16x512xi32> to vector<16x512xf32>
    %8 = vector.extract_strided_slice %1 {offsets = [1, 0], sizes = [1, 512], strides = [1, 1]} : vector<2x512xi32> to vector<1x512xi32>
    %9 = vector.broadcast %8 : vector<1x512xi32> to vector<16x512xi32>
    %10 = vector.broadcast %0 : vector<16x1xi32> to vector<16x512xi32>
    %11 = arith.cmpi eq, %9, %10 : vector<16x512xi32>
    %12 = arith.extui %11 : vector<16x512xi1> to vector<16x512xi32>
    %13 = arith.sitofp %12 : vector<16x512xi32> to vector<16x512xf32>
    %14 = tpu.concatenate %7, %13 in 0 : vector<16x512xf32>, vector<16x512xf32> -> vector<32x512xf32>
    %c0_1 = arith.constant 0 : index
    %c0_2 = arith.constant 0 : index
    %15 = vector.load %arg4[%c0_1, %c0_2] : memref<2x512xi32, #tpu.memory_space<vmem>>, vector<2x512xi32>
    %c0_3 = arith.constant 0 : index
    %c0_4 = arith.constant 0 : index
    %16 = vector.load %arg2[%c0_3, %c0_4] : memref<32x32xf32, #tpu.memory_space<vmem>>, vector<16x32xf32>
    %cst = arith.constant dense<0.000000e+00> : vector<16x512xf32>
    %17 = tpu.matmul %16, %14, %cst {dimension_numbers = #tpu.dot_dimension_numbers<[1], [0], [0], [1], [0, 0, 1, 1], [], []>} : vector<16x32xf32>, vector<32x512xf32>, vector<16x512xf32> -> vector<16x512xf32>
    %c0_5 = arith.constant 0 : index
    %c0_6 = arith.constant 0 : index
    %18 = vector.load %arg3[%c0_5, %c0_6] : memref<32x1xf32, #tpu.memory_space<vmem>>, vector<16x1xf32>
    %19 = vector.broadcast %18 : vector<16x1xf32> to vector<16x512xf32>
    %20 = arith.addf %17, %19 : vector<16x512xf32>
    %21 = vector.extract_strided_slice %15 {offsets = [0, 0], sizes = [1, 512], strides = [1, 1]} : vector<2x512xi32> to vector<1x512xi32>
    %cst_7 = arith.constant dense<0xFF800000> : vector<512xf32>
    %22 = vector.multi_reduction <maximumf>, %20, %cst_7 [0] : vector<16x512xf32> to vector<512xf32>
    %23 = vector.shape_cast %22 : vector<512xf32> to vector<1x512xf32>
    %24 = vector.broadcast %23 : vector<1x512xf32> to vector<16x512xf32>
    %25 = arith.cmpf oeq, %20, %24 : vector<16x512xf32>
    %c16_i32 = arith.constant 16 : i32
    %26 = vector.shape_cast %0 : vector<16x1xi32> to vector<16x1xi32>
    %27 = vector.broadcast %26 : vector<16x1xi32> to vector<16x512xi32>
    %28 = vector.broadcast %c16_i32 : i32 to vector<16x512xi32>
    %29 = arith.select %25, %27, %28 : vector<16x512xi1>, vector<16x512xi32>
    %cst_8 = arith.constant dense<2147483647> : vector<512xi32>
    %30 = vector.multi_reduction <minsi>, %29, %cst_8 [0] : vector<16x512xi32> to vector<512xi32>
    %31 = vector.shape_cast %30 : vector<512xi32> to vector<1x512xi32>
    %32 = vector.broadcast %0 : vector<16x1xi32> to vector<16x512xi32>
    %33 = vector.broadcast %31 : vector<1x512xi32> to vector<16x512xi32>
    %34 = arith.cmpi eq, %32, %33 : vector<16x512xi32>
    %35 = vector.extract_strided_slice %20 {offsets = [0, 0], sizes = [1, 512], strides = [1, 1]} : vector<16x512xf32> to vector<1x512xf32>
    %36 = vector.shape_cast %35 : vector<1x512xf32> to vector<1x512xf32>
    %37 = vector.broadcast %36 : vector<1x512xf32> to vector<16x512xf32>
    %38 = arith.select %34, %37, %20 : vector<16x512xi1>, vector<16x512xf32>
    %39 = arith.cmpi eq, %21, %31 : vector<1x512xi32>
    %c0_i32 = arith.constant 0 : i32
    %40 = vector.broadcast %c0_i32 : i32 to vector<1x512xi32>
    %41 = arith.cmpi eq, %21, %40 : vector<1x512xi32>
    %42 = arith.select %41, %31, %21 : vector<1x512xi1>, vector<1x512xi32>
    %c0_i32_9 = arith.constant 0 : i32
    %43 = vector.broadcast %c0_i32_9 : i32 to vector<1x512xi32>
    %44 = arith.select %39, %43, %42 : vector<1x512xi1>, vector<1x512xi32>
    %c1_i32 = arith.constant 1 : i32
    %45 = vector.broadcast %c1_i32 : i32 to vector<16x1xi32>
    %46 = arith.cmpi sge, %0, %45 : vector<16x1xi32>
    %cst_10 = arith.constant 0xFF800000 : f32
    %47 = vector.shape_cast %46 : vector<16x1xi1> to vector<16x1xi1>
    %48 = vector.broadcast %47 : vector<16x1xi1> to vector<16x512xi1>
    %49 = vector.broadcast %cst_10 : f32 to vector<16x512xf32>
    %50 = arith.select %48, %38, %49 : vector<16x512xi1>, vector<16x512xf32>
    %cst_11 = arith.constant dense<0xFF800000> : vector<512xf32>
    %51 = vector.multi_reduction <maximumf>, %50, %cst_11 [0] : vector<16x512xf32> to vector<512xf32>
    %52 = vector.shape_cast %51 : vector<512xf32> to vector<1x512xf32>
    %53 = vector.broadcast %52 : vector<1x512xf32> to vector<16x512xf32>
    %54 = arith.cmpf oeq, %50, %53 : vector<16x512xf32>
    %c16_i32_12 = arith.constant 16 : i32
    %55 = vector.shape_cast %0 : vector<16x1xi32> to vector<16x1xi32>
    %56 = vector.broadcast %55 : vector<16x1xi32> to vector<16x512xi32>
    %57 = vector.broadcast %c16_i32_12 : i32 to vector<16x512xi32>
    %58 = arith.select %54, %56, %57 : vector<16x512xi1>, vector<16x512xi32>
    %cst_13 = arith.constant dense<2147483647> : vector<512xi32>
    %59 = vector.multi_reduction <minsi>, %58, %cst_13 [0] : vector<16x512xi32> to vector<512xi32>
    %60 = vector.shape_cast %59 : vector<512xi32> to vector<1x512xi32>
    %61 = vector.broadcast %0 : vector<16x1xi32> to vector<16x512xi32>
    %62 = vector.broadcast %60 : vector<1x512xi32> to vector<16x512xi32>
    %63 = arith.cmpi eq, %61, %62 : vector<16x512xi32>
    %64 = vector.extract_strided_slice %38 {offsets = [1, 0], sizes = [1, 512], strides = [1, 1]} : vector<16x512xf32> to vector<1x512xf32>
    %65 = vector.shape_cast %64 : vector<1x512xf32> to vector<1x512xf32>
    %66 = vector.broadcast %65 : vector<1x512xf32> to vector<16x512xf32>
    %67 = arith.select %63, %66, %38 : vector<16x512xi1>, vector<16x512xf32>
    %68 = arith.cmpi eq, %44, %60 : vector<1x512xi32>
    %c1_i32_14 = arith.constant 1 : i32
    %69 = vector.broadcast %c1_i32_14 : i32 to vector<1x512xi32>
    %70 = arith.cmpi eq, %44, %69 : vector<1x512xi32>
    %71 = arith.select %70, %60, %44 : vector<1x512xi1>, vector<1x512xi32>
    %c1_i32_15 = arith.constant 1 : i32
    %72 = vector.broadcast %c1_i32_15 : i32 to vector<1x512xi32>
    %73 = arith.select %68, %72, %71 : vector<1x512xi1>, vector<1x512xi32>
    %c2_i32 = arith.constant 2 : i32
    %74 = vector.broadcast %c2_i32 : i32 to vector<16x1xi32>
    %75 = arith.cmpi sge, %0, %74 : vector<16x1xi32>
    %cst_16 = arith.constant 0xFF800000 : f32
    %76 = vector.shape_cast %75 : vector<16x1xi1> to vector<16x1xi1>
    %77 = vector.broadcast %76 : vector<16x1xi1> to vector<16x512xi1>
    %78 = vector.broadcast %cst_16 : f32 to vector<16x512xf32>
    %79 = arith.select %77, %67, %78 : vector<16x512xi1>, vector<16x512xf32>
    %cst_17 = arith.constant dense<0xFF800000> : vector<512xf32>
    %80 = vector.multi_reduction <maximumf>, %79, %cst_17 [0] : vector<16x512xf32> to vector<512xf32>
    %81 = vector.shape_cast %80 : vector<512xf32> to vector<1x512xf32>
    %82 = vector.broadcast %81 : vector<1x512xf32> to vector<16x512xf32>
    %83 = arith.cmpf oeq, %79, %82 : vector<16x512xf32>
    %c16_i32_18 = arith.constant 16 : i32
    %84 = vector.shape_cast %0 : vector<16x1xi32> to vector<16x1xi32>
    %85 = vector.broadcast %84 : vector<16x1xi32> to vector<16x512xi32>
    %86 = vector.broadcast %c16_i32_18 : i32 to vector<16x512xi32>
    %87 = arith.select %83, %85, %86 : vector<16x512xi1>, vector<16x512xi32>
    %cst_19 = arith.constant dense<2147483647> : vector<512xi32>
    %88 = vector.multi_reduction <minsi>, %87, %cst_19 [0] : vector<16x512xi32> to vector<512xi32>
    %89 = vector.shape_cast %88 : vector<512xi32> to vector<1x512xi32>
    %90 = vector.broadcast %0 : vector<16x1xi32> to vector<16x512xi32>
    %91 = vector.broadcast %89 : vector<1x512xi32> to vector<16x512xi32>
    %92 = arith.cmpi eq, %90, %91 : vector<16x512xi32>
    %93 = vector.extract_strided_slice %67 {offsets = [2, 0], sizes = [1, 512], strides = [1, 1]} : vector<16x512xf32> to vector<1x512xf32>
    %94 = vector.shape_cast %93 : vector<1x512xf32> to vector<1x512xf32>
    %95 = vector.broadcast %94 : vector<1x512xf32> to vector<16x512xf32>
    %96 = arith.select %92, %95, %67 : vector<16x512xi1>, vector<16x512xf32>
    %97 = arith.cmpi eq, %73, %89 : vector<1x512xi32>
    %c2_i32_20 = arith.constant 2 : i32
    %98 = vector.broadcast %c2_i32_20 : i32 to vector<1x512xi32>
    %99 = arith.cmpi eq, %73, %98 : vector<1x512xi32>
    %100 = arith.select %99, %89, %73 : vector<1x512xi1>, vector<1x512xi32>
    %c2_i32_21 = arith.constant 2 : i32
    %101 = vector.broadcast %c2_i32_21 : i32 to vector<1x512xi32>
    %102 = arith.select %97, %101, %100 : vector<1x512xi1>, vector<1x512xi32>
    %c3_i32 = arith.constant 3 : i32
    %103 = vector.broadcast %c3_i32 : i32 to vector<16x1xi32>
    %104 = arith.cmpi sge, %0, %103 : vector<16x1xi32>
    %cst_22 = arith.constant 0xFF800000 : f32
    %105 = vector.shape_cast %104 : vector<16x1xi1> to vector<16x1xi1>
    %106 = vector.broadcast %105 : vector<16x1xi1> to vector<16x512xi1>
    %107 = vector.broadcast %cst_22 : f32 to vector<16x512xf32>
    %108 = arith.select %106, %96, %107 : vector<16x512xi1>, vector<16x512xf32>
    %cst_23 = arith.constant dense<0xFF800000> : vector<512xf32>
    %109 = vector.multi_reduction <maximumf>, %108, %cst_23 [0] : vector<16x512xf32> to vector<512xf32>
    %110 = vector.shape_cast %109 : vector<512xf32> to vector<1x512xf32>
    %111 = vector.broadcast %110 : vector<1x512xf32> to vector<16x512xf32>
    %112 = arith.cmpf oeq, %108, %111 : vector<16x512xf32>
    %c16_i32_24 = arith.constant 16 : i32
    %113 = vector.shape_cast %0 : vector<16x1xi32> to vector<16x1xi32>
    %114 = vector.broadcast %113 : vector<16x1xi32> to vector<16x512xi32>
    %115 = vector.broadcast %c16_i32_24 : i32 to vector<16x512xi32>
    %116 = arith.select %112, %114, %115 : vector<16x512xi1>, vector<16x512xi32>
    %cst_25 = arith.constant dense<2147483647> : vector<512xi32>
    %117 = vector.multi_reduction <minsi>, %116, %cst_25 [0] : vector<16x512xi32> to vector<512xi32>
    %118 = vector.shape_cast %117 : vector<512xi32> to vector<1x512xi32>
    %119 = arith.cmpi eq, %102, %118 : vector<1x512xi32>
    %c3_i32_26 = arith.constant 3 : i32
    %120 = vector.broadcast %c3_i32_26 : i32 to vector<1x512xi32>
    %121 = arith.cmpi eq, %102, %120 : vector<1x512xi32>
    %122 = arith.select %121, %118, %102 : vector<1x512xi1>, vector<1x512xi32>
    %c3_i32_27 = arith.constant 3 : i32
    %123 = vector.broadcast %c3_i32_27 : i32 to vector<1x512xi32>
    %124 = arith.select %119, %123, %122 : vector<1x512xi1>, vector<1x512xi32>
    %c0_28 = arith.constant 0 : index
    %c0_29 = arith.constant 0 : index
    %125 = vector.load %arg5[%c0_28, %c0_29] : memref<2x512xi32, #tpu.memory_space<vmem>>, vector<1x512xi32>
    tpu.vector_store %arg5[%c0_28, %c0_29], %124 {strides = array<i32>} : memref<2x512xi32, #tpu.memory_space<vmem>>, vector<1x512xi32>,
    %c16 = arith.constant 16 : index
    %c0_30 = arith.constant 0 : index
    %126 = vector.load %arg2[%c16, %c0_30] : memref<32x32xf32, #tpu.memory_space<vmem>>, vector<16x32xf32>
    %cst_31 = arith.constant dense<0.000000e+00> : vector<16x512xf32>
    %127 = tpu.matmul %126, %14, %cst_31 {dimension_numbers = #tpu.dot_dimension_numbers<[1], [0], [0], [1], [0, 0, 1, 1], [], []>} : vector<16x32xf32>, vector<32x512xf32>, vector<16x512xf32> -> vector<16x512xf32>
    %c16_32 = arith.constant 16 : index
    %c0_33 = arith.constant 0 : index
    %128 = vector.load %arg3[%c16_32, %c0_33] : memref<32x1xf32, #tpu.memory_space<vmem>>, vector<16x1xf32>
    %129 = vector.broadcast %128 : vector<16x1xf32> to vector<16x512xf32>
    %130 = arith.addf %127, %129 : vector<16x512xf32>
    %131 = vector.extract_strided_slice %15 {offsets = [1, 0], sizes = [1, 512], strides = [1, 1]} : vector<2x512xi32> to vector<1x512xi32>
    %cst_34 = arith.constant dense<0xFF800000> : vector<512xf32>
    %132 = vector.multi_reduction <maximumf>, %130, %cst_34 [0] : vector<16x512xf32> to vector<512xf32>
    %133 = vector.shape_cast %132 : vector<512xf32> to vector<1x512xf32>
    %134 = vector.broadcast %133 : vector<1x512xf32> to vector<16x512xf32>
    %135 = arith.cmpf oeq, %130, %134 : vector<16x512xf32>
    %c16_i32_35 = arith.constant 16 : i32
    %136 = vector.shape_cast %0 : vector<16x1xi32> to vector<16x1xi32>
    %137 = vector.broadcast %136 : vector<16x1xi32> to vector<16x512xi32>
    %138 = vector.broadcast %c16_i32_35 : i32 to vector<16x512xi32>
    %139 = arith.select %135, %137, %138 : vector<16x512xi1>, vector<16x512xi32>
    %cst_36 = arith.constant dense<2147483647> : vector<512xi32>
    %140 = vector.multi_reduction <minsi>, %139, %cst_36 [0] : vector<16x512xi32> to vector<512xi32>
    %141 = vector.shape_cast %140 : vector<512xi32> to vector<1x512xi32>
    %142 = vector.broadcast %0 : vector<16x1xi32> to vector<16x512xi32>
    %143 = vector.broadcast %141 : vector<1x512xi32> to vector<16x512xi32>
    %144 = arith.cmpi eq, %142, %143 : vector<16x512xi32>
    %145 = vector.extract_strided_slice %130 {offsets = [0, 0], sizes = [1, 512], strides = [1, 1]} : vector<16x512xf32> to vector<1x512xf32>
    %146 = vector.shape_cast %145 : vector<1x512xf32> to vector<1x512xf32>
    %147 = vector.broadcast %146 : vector<1x512xf32> to vector<16x512xf32>
    %148 = arith.select %144, %147, %130 : vector<16x512xi1>, vector<16x512xf32>
    %149 = arith.cmpi eq, %131, %141 : vector<1x512xi32>
    %c0_i32_37 = arith.constant 0 : i32
    %150 = vector.broadcast %c0_i32_37 : i32 to vector<1x512xi32>
    %151 = arith.cmpi eq, %131, %150 : vector<1x512xi32>
    %152 = arith.select %151, %141, %131 : vector<1x512xi1>, vector<1x512xi32>
    %c0_i32_38 = arith.constant 0 : i32
    %153 = vector.broadcast %c0_i32_38 : i32 to vector<1x512xi32>
    %154 = arith.select %149, %153, %152 : vector<1x512xi1>, vector<1x512xi32>
    %c1_i32_39 = arith.constant 1 : i32
    %155 = vector.broadcast %c1_i32_39 : i32 to vector<16x1xi32>
    %156 = arith.cmpi sge, %0, %155 : vector<16x1xi32>
    %cst_40 = arith.constant 0xFF800000 : f32
    %157 = vector.shape_cast %156 : vector<16x1xi1> to vector<16x1xi1>
    %158 = vector.broadcast %157 : vector<16x1xi1> to vector<16x512xi1>
    %159 = vector.broadcast %cst_40 : f32 to vector<16x512xf32>
    %160 = arith.select %158, %148, %159 : vector<16x512xi1>, vector<16x512xf32>
    %cst_41 = arith.constant dense<0xFF800000> : vector<512xf32>
    %161 = vector.multi_reduction <maximumf>, %160, %cst_41 [0] : vector<16x512xf32> to vector<512xf32>
    %162 = vector.shape_cast %161 : vector<512xf32> to vector<1x512xf32>
    %163 = vector.broadcast %162 : vector<1x512xf32> to vector<16x512xf32>
    %164 = arith.cmpf oeq, %160, %163 : vector<16x512xf32>
    %c16_i32_42 = arith.constant 16 : i32
    %165 = vector.shape_cast %0 : vector<16x1xi32> to vector<16x1xi32>
    %166 = vector.broadcast %165 : vector<16x1xi32> to vector<16x512xi32>
    %167 = vector.broadcast %c16_i32_42 : i32 to vector<16x512xi32>
    %168 = arith.select %164, %166, %167 : vector<16x512xi1>, vector<16x512xi32>
    %cst_43 = arith.constant dense<2147483647> : vector<512xi32>
    %169 = vector.multi_reduction <minsi>, %168, %cst_43 [0] : vector<16x512xi32> to vector<512xi32>
    %170 = vector.shape_cast %169 : vector<512xi32> to vector<1x512xi32>
    %171 = vector.broadcast %0 : vector<16x1xi32> to vector<16x512xi32>
    %172 = vector.broadcast %170 : vector<1x512xi32> to vector<16x512xi32>
    %173 = arith.cmpi eq, %171, %172 : vector<16x512xi32>
    %174 = vector.extract_strided_slice %148 {offsets = [1, 0], sizes = [1, 512], strides = [1, 1]} : vector<16x512xf32> to vector<1x512xf32>
    %175 = vector.shape_cast %174 : vector<1x512xf32> to vector<1x512xf32>
    %176 = vector.broadcast %175 : vector<1x512xf32> to vector<16x512xf32>
    %177 = arith.select %173, %176, %148 : vector<16x512xi1>, vector<16x512xf32>
    %178 = arith.cmpi eq, %154, %170 : vector<1x512xi32>
    %c1_i32_44 = arith.constant 1 : i32
    %179 = vector.broadcast %c1_i32_44 : i32 to vector<1x512xi32>
    %180 = arith.cmpi eq, %154, %179 : vector<1x512xi32>
    %181 = arith.select %180, %170, %154 : vector<1x512xi1>, vector<1x512xi32>
    %c1_i32_45 = arith.constant 1 : i32
    %182 = vector.broadcast %c1_i32_45 : i32 to vector<1x512xi32>
    %183 = arith.select %178, %182, %181 : vector<1x512xi1>, vector<1x512xi32>
    %c2_i32_46 = arith.constant 2 : i32
    %184 = vector.broadcast %c2_i32_46 : i32 to vector<16x1xi32>
    %185 = arith.cmpi sge, %0, %184 : vector<16x1xi32>
    %cst_47 = arith.constant 0xFF800000 : f32
    %186 = vector.shape_cast %185 : vector<16x1xi1> to vector<16x1xi1>
    %187 = vector.broadcast %186 : vector<16x1xi1> to vector<16x512xi1>
    %188 = vector.broadcast %cst_47 : f32 to vector<16x512xf32>
    %189 = arith.select %187, %177, %188 : vector<16x512xi1>, vector<16x512xf32>
    %cst_48 = arith.constant dense<0xFF800000> : vector<512xf32>
    %190 = vector.multi_reduction <maximumf>, %189, %cst_48 [0] : vector<16x512xf32> to vector<512xf32>
    %191 = vector.shape_cast %190 : vector<512xf32> to vector<1x512xf32>
    %192 = vector.broadcast %191 : vector<1x512xf32> to vector<16x512xf32>
    %193 = arith.cmpf oeq, %189, %192 : vector<16x512xf32>
    %c16_i32_49 = arith.constant 16 : i32
    %194 = vector.shape_cast %0 : vector<16x1xi32> to vector<16x1xi32>
    %195 = vector.broadcast %194 : vector<16x1xi32> to vector<16x512xi32>
    %196 = vector.broadcast %c16_i32_49 : i32 to vector<16x512xi32>
    %197 = arith.select %193, %195, %196 : vector<16x512xi1>, vector<16x512xi32>
    %cst_50 = arith.constant dense<2147483647> : vector<512xi32>
    %198 = vector.multi_reduction <minsi>, %197, %cst_50 [0] : vector<16x512xi32> to vector<512xi32>
    %199 = vector.shape_cast %198 : vector<512xi32> to vector<1x512xi32>
    %200 = vector.broadcast %0 : vector<16x1xi32> to vector<16x512xi32>
    %201 = vector.broadcast %199 : vector<1x512xi32> to vector<16x512xi32>
    %202 = arith.cmpi eq, %200, %201 : vector<16x512xi32>
    %203 = vector.extract_strided_slice %177 {offsets = [2, 0], sizes = [1, 512], strides = [1, 1]} : vector<16x512xf32> to vector<1x512xf32>
    %204 = vector.shape_cast %203 : vector<1x512xf32> to vector<1x512xf32>
    %205 = vector.broadcast %204 : vector<1x512xf32> to vector<16x512xf32>
    %206 = arith.select %202, %205, %177 : vector<16x512xi1>, vector<16x512xf32>
    %207 = arith.cmpi eq, %183, %199 : vector<1x512xi32>
    %c2_i32_51 = arith.constant 2 : i32
    %208 = vector.broadcast %c2_i32_51 : i32 to vector<1x512xi32>
    %209 = arith.cmpi eq, %183, %208 : vector<1x512xi32>
    %210 = arith.select %209, %199, %183 : vector<1x512xi1>, vector<1x512xi32>
    %c2_i32_52 = arith.constant 2 : i32
    %211 = vector.broadcast %c2_i32_52 : i32 to vector<1x512xi32>
    %212 = arith.select %207, %211, %210 : vector<1x512xi1>, vector<1x512xi32>
    %c3_i32_53 = arith.constant 3 : i32
    %213 = vector.broadcast %c3_i32_53 : i32 to vector<16x1xi32>
    %214 = arith.cmpi sge, %0, %213 : vector<16x1xi32>
    %cst_54 = arith.constant 0xFF800000 : f32
    %215 = vector.shape_cast %214 : vector<16x1xi1> to vector<16x1xi1>
    %216 = vector.broadcast %215 : vector<16x1xi1> to vector<16x512xi1>
    %217 = vector.broadcast %cst_54 : f32 to vector<16x512xf32>
    %218 = arith.select %216, %206, %217 : vector<16x512xi1>, vector<16x512xf32>
    %cst_55 = arith.constant dense<0xFF800000> : vector<512xf32>
    %219 = vector.multi_reduction <maximumf>, %218, %cst_55 [0] : vector<16x512xf32> to vector<512xf32>
    %220 = vector.shape_cast %219 : vector<512xf32> to vector<1x512xf32>
    %221 = vector.broadcast %220 : vector<1x512xf32> to vector<16x512xf32>
    %222 = arith.cmpf oeq, %218, %221 : vector<16x512xf32>
    %c16_i32_56 = arith.constant 16 : i32
    %223 = vector.shape_cast %0 : vector<16x1xi32> to vector<16x1xi32>
    %224 = vector.broadcast %223 : vector<16x1xi32> to vector<16x512xi32>
    %225 = vector.broadcast %c16_i32_56 : i32 to vector<16x512xi32>
    %226 = arith.select %222, %224, %225 : vector<16x512xi1>, vector<16x512xi32>
    %cst_57 = arith.constant dense<2147483647> : vector<512xi32>
    %227 = vector.multi_reduction <minsi>, %226, %cst_57 [0] : vector<16x512xi32> to vector<512xi32>
    %228 = vector.shape_cast %227 : vector<512xi32> to vector<1x512xi32>
    %229 = arith.cmpi eq, %212, %228 : vector<1x512xi32>
    %c3_i32_58 = arith.constant 3 : i32
    %230 = vector.broadcast %c3_i32_58 : i32 to vector<1x512xi32>
    %231 = arith.cmpi eq, %212, %230 : vector<1x512xi32>
    %232 = arith.select %231, %228, %212 : vector<1x512xi1>, vector<1x512xi32>
    %c3_i32_59 = arith.constant 3 : i32
    %233 = vector.broadcast %c3_i32_59 : i32 to vector<1x512xi32>
    %234 = arith.select %229, %233, %232 : vector<1x512xi1>, vector<1x512xi32>
    %c1 = arith.constant 1 : index
    %c0_60 = arith.constant 0 : index
    %235 = vector.load %arg5[%c1, %c0_60] : memref<2x512xi32, #tpu.memory_space<vmem>>, vector<1x512xi32>
    tpu.vector_store %arg5[%c1, %c0_60], %234 {strides = array<i32>} : memref<2x512xi32, #tpu.memory_space<vmem>>, vector<1x512xi32>,
    return
  }
  func.func @transform_0(%arg0: i32) -> (i32, i32) {
    %c0_i32 = arith.constant 0 : i32
    %c0_i32_0 = arith.constant 0 : i32
    return %c0_i32, %arg0 : i32, i32
  }
  func.func @transform_1(%arg0: i32) -> (i32, i32) {
    %c0_i32 = arith.constant 0 : i32
    %c0_i32_0 = arith.constant 0 : i32
    %c0_i32_1 = arith.constant 0 : i32
    return %c0_i32, %c0_i32_0 : i32, i32
  }
  func.func @transform_2(%arg0: i32) -> (i32, i32) {
    %c0_i32 = arith.constant 0 : i32
    %c0_i32_0 = arith.constant 0 : i32
    %c0_i32_1 = arith.constant 0 : i32
    return %c0_i32, %c0_i32_0 : i32, i32
  }
  func.func @transform_3(%arg0: i32) -> (i32, i32) {
    %c0_i32 = arith.constant 0 : i32
    %c0_i32_0 = arith.constant 0 : i32
    return %c0_i32, %arg0 : i32, i32
  }
  func.func @transform_4(%arg0: i32) -> (i32, i32) {
    %c0_i32 = arith.constant 0 : i32
    %c0_i32_0 = arith.constant 0 : i32
    return %c0_i32, %arg0 : i32, i32
  }
}

</mosaic_0001>

<llo_original>
// kernel: tpu_custom_call.1
$region0: #{tpu_custom_call.1}
  #allocation0 [shape = 'u32[]', space=smem, size = 0x4, offset = 0x4, fixed_abs, tag = 'smem constant byte address 0x4 - core index']
  #allocation1 [shape = 'u32[144,128]{1,0:T(1,128)}', space=vmem, size = 0x12000, scoped, tag = 'internal scratch']
  %s0 = inlined_call_operand.hbm [shape: s32[2,512], index: 0, kind: input, shape index: {}]
  %s1 = inlined_call_operand.vmem [shape: f32[32,32], index: 1, kind: input, shape index: {}]
  %s2 = inlined_call_operand.vmem [shape: f32[32,1], index: 2, kind: input, shape index: {}]
  %s3 = inlined_call_operand.hbm [shape: s32[2,512], index: 3, kind: input, shape index: {}]
  %s4 = inlined_call_operand.hbm [shape: s32[2,512], index: 4, kind: output, shape index: {}]
  %s5 = sld [smem:[#allocation0]]
  $region34: #{tpu_custom_call.1} parent=0
    _
  %s7 = ssub.s32 1, %s5
  %s8 = scalar_select 0, %s7, %s5
  $region1: #{tpu_custom_call.1} parent=0
    #allocation2 [shape = 'u8[4096]{0}', space=vmem, size = 0x1000, scoped, tag = 'input window, operand 0, single buffered']
    #allocation3 [shape = 's32[1]{0}', space=sflag, size = 0x4, scoped, tag = 'scoped memory for tpu_custom_call.1']
    #allocation4 [shape = 's32[1]{0}', space=sflag, size = 0x4, scoped, tag = 'scoped memory for tpu_custom_call.1']
    #allocation5 [shape = 'u8[4096]{0}', space=vmem, size = 0x1000, scoped, tag = 'input window, operand 3, single buffered']
    #allocation6 [shape = 's32[1]{0}', space=sflag, size = 0x4, scoped, tag = 'scoped memory for tpu_custom_call.1']
    #allocation7 [shape = 'u8[4096]{0}', space=vmem, size = 0x1000, scoped, tag = 'output window, operand 0, single buffered']
    %9 = vsyncpa [#allocation3], 0
    %10 = vsyncpa [#allocation6], 0
    %11 = vsyncpa [#allocation4], 0
    // Predicated region
    $region2: #{tpu_custom_call.1} parent=1 // pred_check
      _
    $region3: #{tpu_custom_call.1} parent=1 // pred_check_branch
      %13 = sbr.rel (0) target = $region5
    $region4: #{tpu_custom_call.1} parent=1 // pred_region
      %s15 = ssub.s32 128, 128
      %16 = vsyncadd [#allocation3], %s15
      %s18 = sshll.u32 [#allocation2], 4
      %s19 = int_to_ptr.vmem [resolvable:$true] %s18
      %21 = dma.hbm_to_vmem [thread:$0]  %s0, 128, %s19, [#allocation3]
    $region5: #{tpu_custom_call.1} parent=1 // pred_fallthru
      _
    // Predicated region
    $region6: #{tpu_custom_call.1} parent=1 // pred_check
      _
    $region7: #{tpu_custom_call.1} parent=1 // pred_check_branch
      %23 = sbr.rel (0) target = $region9
    $region8: #{tpu_custom_call.1} parent=1 // pred_region
      _
    $region9: #{tpu_custom_call.1} parent=1 // pred_fallthru
      _
    // Predicated region
    $region10: #{tpu_custom_call.1} parent=1 // pred_check
      _
    $region11: #{tpu_custom_call.1} parent=1 // pred_check_branch
      %25 = sbr.rel (0) target = $region13
    $region12: #{tpu_custom_call.1} parent=1 // pred_region
      _
    $region13: #{tpu_custom_call.1} parent=1 // pred_fallthru
      _
    // Predicated region
    $region14: #{tpu_custom_call.1} parent=1 // pred_check
      _
    $region15: #{tpu_custom_call.1} parent=1 // pred_check_branch
      %27 = sbr.rel (0) target = $region17
    $region16: #{tpu_custom_call.1} parent=1 // pred_region
      %s29 = ssub.s32 128, 128
      %30 = vsyncadd [#allocation6], %s29
      %s32 = sshll.u32 [#allocation5], 4
      %s33 = int_to_ptr.vmem [resolvable:$true] %s32
      %35 = dma.hbm_to_vmem [thread:$0]  %s3, 128, %s33, [#allocation6]
    $region17: #{tpu_custom_call.1} parent=1 // pred_fallthru
      _
    // Predicated region
    $region18: #{tpu_custom_call.1} parent=1 // pred_check
      _
    $region19: #{tpu_custom_call.1} parent=1 // pred_check_branch
      %37 = sbr.rel (0) target = $region21
    $region20: #{tpu_custom_call.1} parent=1 // pred_region
      %38 = dma.done [#allocation3], 128
    $region21: #{tpu_custom_call.1} parent=1 // pred_fallthru
      _
    // Predicated region
    $region22: #{tpu_custom_call.1} parent=1 // pred_check
      _
    $region23: #{tpu_custom_call.1} parent=1 // pred_check_branch
      %40 = sbr.rel (0) target = $region25
    $region24: #{tpu_custom_call.1} parent=1 // pred_region
      %41 = dma.done [#allocation6], 128
    $region25: #{tpu_custom_call.1} parent=1 // pred_fallthru
      _
    %v42 = vlaneseq
    %v43 = vshrl.u32 %v42, 7
    %v44 = vadd.s32 %v43, 8
    %v45 = vld [vmem:[#allocation2] sm:$0xff]
    %v46 = vlaneseq
    %v47 = vshrl.u32 %v46, 7
    %v48 = vsub.s32 0, %v47
    %v49 = vrot.slane %v45, %v48
    %v50 = vlaneseq
    %v51 = vshrl.u32 %v50, 7
    %v52 = vsub.s32 2, %v51
    %v53 = vrot.slane %v45, %v52
    %v54 = vlaneseq
    %v55 = vshrl.u32 %v54, 7
    %v56 = vsub.s32 4, %v55
    %v57 = vrot.slane %v45, %v56
    %v58 = vlaneseq
    %v59 = vshrl.u32 %v58, 7
    %v60 = vsub.s32 6, %v59
    %v61 = vrot.slane %v45, %v60
    %v62 = vlaneseq
    %v63 = vshrl.u32 %v62, 7
    %v64 = vsub.s32 0, %v63
    %v65 = vrot.slane %v49, %v64
    %v66 = vlaneseq
    %v67 = vshrl.u32 %v66, 7
    %v68 = vsub.s32 0, %v67
    %v69 = vrot.slane %v53, %v68
    %v70 = vlaneseq
    %v71 = vshrl.u32 %v70, 7
    %v72 = vsub.s32 0, %v71
    %v73 = vrot.slane %v57, %v72
    %v74 = vlaneseq
    %v75 = vshrl.u32 %v74, 7
    %v76 = vsub.s32 0, %v75
    %v77 = vrot.slane %v61, %v76
    %vm78 = vcmp.eq.s32.totalorder %v65, %v43
    %vm79 = vcmp.eq.s32.totalorder %v69, %v43
    %vm80 = vcmp.eq.s32.totalorder %v73, %v43
    %vm81 = vcmp.eq.s32.totalorder %v77, %v43
    %vm82 = vcmp.eq.s32.totalorder %v65, %v44
    %vm83 = vcmp.eq.s32.totalorder %v69, %v44
    %vm84 = vcmp.eq.s32.totalorder %v73, %v44
    %vm85 = vcmp.eq.s32.totalorder %v77, %v44
    %v86 = vsel %vm78, 1, 0
    %v87 = vsel %vm79, 1, 0
    %v88 = vsel %vm80, 1, 0
    %v89 = vsel %vm81, 1, 0
    %v90 = vsel %vm82, 1, 0
    %v91 = vsel %vm83, 1, 0
    %v92 = vsel %vm84, 1, 0
    %v93 = vsel %vm85, 1, 0
    %v94 = vcvt.s32.f32 %v86
    %v95 = vcvt.s32.f32 %v87
    %v96 = vcvt.s32.f32 %v88
    %v97 = vcvt.s32.f32 %v89
    %v98 = vcvt.s32.f32 %v90
    %v99 = vcvt.s32.f32 %v91
    %v100 = vcvt.s32.f32 %v92
    %v101 = vcvt.s32.f32 %v93
    %v102 = vlaneseq
    %v103 = vshrl.u32 %v102, 7
    %v104 = vsub.s32 1, %v103
    %v105 = vrot.slane %v45, %v104
    %v106 = vlaneseq
    %v107 = vshrl.u32 %v106, 7
    %v108 = vsub.s32 3, %v107
    %v109 = vrot.slane %v45, %v108
    %v110 = vlaneseq
    %v111 = vshrl.u32 %v110, 7
    %v112 = vsub.s32 5, %v111
    %v113 = vrot.slane %v45, %v112
    %v114 = vlaneseq
    %v115 = vshrl.u32 %v114, 7
    %v116 = vsub.s32 7, %v115
    %v117 = vrot.slane %v45, %v116
    %v118 = vlaneseq
    %v119 = vshrl.u32 %v118, 7
    %v120 = vsub.s32 1, %v119
    %v121 = vrot.slane %v105, %v120
    %v122 = vlaneseq
    %v123 = vshrl.u32 %v122, 7
    %v124 = vsub.s32 1, %v123
    %v125 = vrot.slane %v109, %v124
    %v126 = vlaneseq
    %v127 = vshrl.u32 %v126, 7
    %v128 = vsub.s32 1, %v127
    %v129 = vrot.slane %v113, %v128
    %v130 = vlaneseq
    %v131 = vshrl.u32 %v130, 7
    %v132 = vsub.s32 1, %v131
    %v133 = vrot.slane %v117, %v132
    %vm134 = vcmp.eq.s32.totalorder %v121, %v43
    %vm135 = vcmp.eq.s32.totalorder %v125, %v43
    %vm136 = vcmp.eq.s32.totalorder %v129, %v43
    %vm137 = vcmp.eq.s32.totalorder %v133, %v43
    %vm138 = vcmp.eq.s32.totalorder %v121, %v44
    %vm139 = vcmp.eq.s32.totalorder %v125, %v44
    %vm140 = vcmp.eq.s32.totalorder %v129, %v44
    %vm141 = vcmp.eq.s32.totalorder %v133, %v44
    %v142 = vsel %vm134, 1, 0
    %v143 = vsel %vm135, 1, 0
    %v144 = vsel %vm136, 1, 0
    %v145 = vsel %vm137, 1, 0
    %v146 = vsel %vm138, 1, 0
    %v147 = vsel %vm139, 1, 0
    %v148 = vsel %vm140, 1, 0
    %v149 = vsel %vm141, 1, 0
    %v150 = vcvt.s32.f32 %v142
    %v151 = vcvt.s32.f32 %v143
    %v152 = vcvt.s32.f32 %v144
    %v153 = vcvt.s32.f32 %v145
    %v154 = vcvt.s32.f32 %v146
    %v155 = vcvt.s32.f32 %v147
    %v156 = vcvt.s32.f32 %v148
    %v157 = vcvt.s32.f32 %v149
    %v158 = vld [vmem:[#allocation5] sm:$0xff]
    %v159 = vld [vmem:[%s1] sm:$0xff]
    %v160 = vld [vmem:[%s1 + $0x8] sm:$0xff]
    %v161 = vld [vmem:[%s2] sm:$0xff]
    %v162 = vld [vmem:[%s2 + $0x8] sm:$0xff]
    %164 = vset.pattern.permute.xlu0 0
    %165 = vperm.xlu0 %164, %v161
    %v166 = vpop.permute.xlu0 %165
    %169 = vset.pattern.permute.xlu0 0
    %170 = vperm.xlu0 %169, %v162
    %v171 = vpop.permute.xlu0 %170
    %vm173 = vcmask 261120
    %v175 = vsel %vm173, %v159, 0
    %v178 = vsel %vm173, %v160, 0
    %180 = vmatprep.subr.mxu0 0.0
    %181 = vmatpush1.msra.mxu0 0.0
    %182 = vmatprep.subr.mxu0 0.0
    %183 = vmatpush1.msra.mxu0 0.0
    %184 = vmatprep.subr.mxu0 0.0
    %185 = vmatpush1.msra.mxu0 0.0
    %186 = vmatprep.subr.mxu0 0.0
    %187 = vmatpush1.msra.mxu0 0.0
    %188 = vmatprep.subr.mxu0 0.0
    %189 = vmatpush1.msra.mxu0 0.0
    %190 = vmatprep.subr.mxu0 0.0
    %191 = vmatpush1.msra.mxu0 0.0
    %192 = vmatprep.subr.mxu0 0.0
    %193 = vmatpush1.msra.mxu0 0.0
    %194 = vmatprep.subr.mxu0 0.0
    %195 = vmatpush1.msra.mxu0 0.0
    %196 = vmatprep.subr.mxu0 0.0
    %197 = vmatpush1.msra.mxu0 0.0
    %198 = vmatprep.subr.mxu0 0.0
    %199 = vmatpush1.msra.mxu0 0.0
    %200 = vmatprep.subr.mxu0 0.0
    %201 = vmatpush1.msra.mxu0 0.0
    %202 = vmatprep.subr.mxu0 0.0
    %203 = vmatpush1.msra.mxu0 0.0
    %204 = vmatprep.subr.mxu0 %v155
    %205 = vmatpush1.msra.mxu0 %v154
    %206 = vmatprep.subr.mxu0 %v151
    %207 = vmatpush1.msra.mxu0 %v150
    %208 = vmatprep.subr.mxu0 %v99
    %209 = vmatpush1.msra.mxu0 %v98
    %210 = vmatprep.subr.mxu0 %v95
    %211 = vmatpush1.msra.mxu0 %v94
    %212 = vmatprep.subr.mxu0 0.0
    %213 = vmatpush2.msra.mxu0 0.0
    %214 = vmatprep.subr.mxu0 0.0
    %215 = vmatpush2.msra.mxu0 0.0
    %216 = vmatprep.subr.mxu0 0.0
    %217 = vmatpush2.msra.mxu0 0.0
    %218 = vmatprep.subr.mxu0 0.0
    %219 = vmatpush2.msra.mxu0 0.0
    %220 = vmatprep.subr.mxu0 0.0
    %221 = vmatpush2.msra.mxu0 0.0
    %222 = vmatprep.subr.mxu0 0.0
    %223 = vmatpush2.msra.mxu0 0.0
    %224 = vmatprep.subr.mxu0 0.0
    %225 = vmatpush2.msra.mxu0 0.0
    %226 = vmatprep.subr.mxu0 0.0
    %227 = vmatpush2.msra.mxu0 0.0
    %228 = vmatprep.subr.mxu0 0.0
    %229 = vmatpush2.msra.mxu0 0.0
    %230 = vmatprep.subr.mxu0 0.0
    %231 = vmatpush2.msra.mxu0 0.0
    %232 = vmatprep.subr.mxu0 0.0
    %233 = vmatpush2.msra.mxu0 0.0
    %234 = vmatprep.subr.mxu0 0.0
    %235 = vmatpush2.msra.mxu0 0.0
    %236 = vmatprep.subr.mxu0 0.0
    %237 = vmatpush2.msra.mxu0 0.0
    %238 = vmatprep.subr.mxu0 0.0
    %239 = vmatpush2.msra.mxu0 0.0
    %240 = vmatprep.subr.mxu0 0.0
    %241 = vmatpush2.msra.mxu0 0.0
    %242 = vmatprep.subr.mxu0 0.0
    %243 = vmatpush2.msra.mxu0 0.0
    %244 = vmatprep.mubr.f32.mxu0 0.0
    %245 = vmatmul.mubr.f32.gmra.mxu0 %v175
    %v246 = vpop.f32.mrf.mxu0
    %v247 = vadd.f32 %v166, %v246
    %v248 = vpop.f32.mrf.mxu0
    %v249 = vadd.f32 %v166, %v248
    %250 = vmatprep.mubr.f32.mxu0 0.0
    %251 = vmatmul.mubr.f32.gmra.mxu0 %v178
    %v252 = vpop.f32.mrf.mxu0
    %v253 = vadd.f32 %v171, %v252
    %v254 = vpop.f32.mrf.mxu0
    %v255 = vadd.f32 %v171, %v254
    %256 = vdwg.mxu0
    %257 = vmatprep.subr.mxu0 0.0
    %258 = vmatpush1.msra.mxu0 0.0
    %259 = vmatprep.subr.mxu0 0.0
    %260 = vmatpush1.msra.mxu0 0.0
    %261 = vmatprep.subr.mxu0 0.0
    %262 = vmatpush1.msra.mxu0 0.0
    %263 = vmatprep.subr.mxu0 0.0
    %264 = vmatpush1.msra.mxu0 0.0
    %265 = vmatprep.subr.mxu0 0.0
    %266 = vmatpush1.msra.mxu0 0.0
    %267 = vmatprep.subr.mxu0 0.0
    %268 = vmatpush1.msra.mxu0 0.0
    %269 = vmatprep.subr.mxu0 0.0
    %270 = vmatpush1.msra.mxu0 0.0
    %271 = vmatprep.subr.mxu0 0.0
    %272 = vmatpush1.msra.mxu0 0.0
    %273 = vmatprep.subr.mxu0 0.0
    %274 = vmatpush1.msra.mxu0 0.0
    %275 = vmatprep.subr.mxu0 0.0
    %276 = vmatpush1.msra.mxu0 0.0
    %277 = vmatprep.subr.mxu0 0.0
    %278 = vmatpush1.msra.mxu0 0.0
    %279 = vmatprep.subr.mxu0 0.0
    %280 = vmatpush1.msra.mxu0 0.0
    %281 = vmatprep.subr.mxu0 %v157
    %282 = vmatpush1.msra.mxu0 %v156
    %283 = vmatprep.subr.mxu0 %v153
    %284 = vmatpush1.msra.mxu0 %v152
    %285 = vmatprep.subr.mxu0 %v101
    %286 = vmatpush1.msra.mxu0 %v100
    %287 = vmatprep.subr.mxu0 %v97
    %288 = vmatpush1.msra.mxu0 %v96
    %289 = vmatprep.subr.mxu0 0.0
    %290 = vmatpush2.msra.mxu0 0.0
    %291 = vmatprep.subr.mxu0 0.0
    %292 = vmatpush2.msra.mxu0 0.0
    %293 = vmatprep.subr.mxu0 0.0
    %294 = vmatpush2.msra.mxu0 0.0
    %295 = vmatprep.subr.mxu0 0.0
    %296 = vmatpush2.msra.mxu0 0.0
    %297 = vmatprep.subr.mxu0 0.0
    %298 = vmatpush2.msra.mxu0 0.0
    %299 = vmatprep.subr.mxu0 0.0
    %300 = vmatpush2.msra.mxu0 0.0
    %301 = vmatprep.subr.mxu0 0.0
    %302 = vmatpush2.msra.mxu0 0.0
    %303 = vmatprep.subr.mxu0 0.0
    %304 = vmatpush2.msra.mxu0 0.0
    %305 = vmatprep.subr.mxu0 0.0
    %306 = vmatpush2.msra.mxu0 0.0
    %307 = vmatprep.subr.mxu0 0.0
    %308 = vmatpush2.msra.mxu0 0.0
    %309 = vmatprep.subr.mxu0 0.0
    %310 = vmatpush2.msra.mxu0 0.0
    %311 = vmatprep.subr.mxu0 0.0
    %312 = vmatpush2.msra.mxu0 0.0
    %313 = vmatprep.subr.mxu0 0.0
    %314 = vmatpush2.msra.mxu0 0.0
    %315 = vmatprep.subr.mxu0 0.0
    %316 = vmatpush2.msra.mxu0 0.0
    %317 = vmatprep.subr.mxu0 0.0
    %318 = vmatpush2.msra.mxu0 0.0
    %319 = vmatprep.subr.mxu0 0.0
    %320 = vmatpush2.msra.mxu0 0.0
    %321 = vmatprep.mubr.f32.mxu0 0.0
    %322 = vmatmul.mubr.f32.gmra.mxu0 %v175
    %v323 = vpop.f32.mrf.mxu0
    %v324 = vadd.f32 %v166, %v323
    %v325 = vpop.f32.mrf.mxu0
    %v326 = vadd.f32 %v166, %v325
    %327 = vmatprep.mubr.f32.mxu0 0.0
    %328 = vmatmul.mubr.f32.gmra.mxu0 %v178
    %v329 = vpop.f32.mrf.mxu0
    %v330 = vadd.f32 %v171, %v329
    %v331 = vpop.f32.mrf.mxu0
    %v332 = vadd.f32 %v171, %v331
    %333 = vdwg.mxu0
    %v334 = vmax.f32 %v247, %v253
    %v335 = vrot.slane %v334, 4
    %v336 = vmax.f32 %v334, %v335
    %v337 = vrot.slane %v336, 2
    %v338 = vmax.f32 %v336, %v337
    %v339 = vrot.slane %v338, 1
    %v340 = vmax.f32 %v338, %v339
    %v341 = vmax.f32 %v249, %v255
    %v342 = vrot.slane %v341, 4
    %v343 = vmax.f32 %v341, %v342
    %v344 = vrot.slane %v343, 2
    %v345 = vmax.f32 %v343, %v344
    %v346 = vrot.slane %v345, 1
    %v347 = vmax.f32 %v345, %v346
    %v348 = vmax.f32 %v324, %v330
    %v349 = vrot.slane %v348, 4
    %v350 = vmax.f32 %v348, %v349
    %v351 = vrot.slane %v350, 2
    %v352 = vmax.f32 %v350, %v351
    %v353 = vrot.slane %v352, 1
    %v354 = vmax.f32 %v352, %v353
    %v355 = vmax.f32 %v326, %v332
    %v356 = vrot.slane %v355, 4
    %v357 = vmax.f32 %v355, %v356
    %v358 = vrot.slane %v357, 2
    %v359 = vmax.f32 %v357, %v358
    %v360 = vrot.slane %v359, 1
    %v361 = vmax.f32 %v359, %v360
    %vm362 = vcmp.eq.f32.partialorder %v247, %v340
    %vm363 = vcmp.eq.f32.partialorder %v249, %v347
    %vm364 = vcmp.eq.f32.partialorder %v324, %v354
    %vm365 = vcmp.eq.f32.partialorder %v326, %v361
    %vm366 = vcmp.eq.f32.partialorder %v253, %v340
    %vm367 = vcmp.eq.f32.partialorder %v255, %v347
    %vm368 = vcmp.eq.f32.partialorder %v330, %v354
    %vm369 = vcmp.eq.f32.partialorder %v332, %v361
    %v370 = vsel %vm362, %v43, 16
    %v371 = vsel %vm363, %v43, 16
    %v372 = vsel %vm364, %v43, 16
    %v373 = vsel %vm365, %v43, 16
    %v374 = vsel %vm366, %v44, 16
    %v375 = vsel %vm367, %v44, 16
    %v376 = vsel %vm368, %v44, 16
    %v377 = vsel %vm369, %v44, 16
    %vm378 = vcmp.lt.s32.totalorder %v370, %v374
    %v379 = vsel %vm378, %v370, %v374
    %v380 = vrot.slane %v379, 4
    %vm381 = vcmp.lt.s32.totalorder %v379, %v380
    %v382 = vsel %vm381, %v379, %v380
    %v383 = vrot.slane %v382, 2
    %vm384 = vcmp.lt.s32.totalorder %v382, %v383
    %v385 = vsel %vm384, %v382, %v383
    %v386 = vrot.slane %v385, 1
    %vm387 = vcmp.lt.s32.totalorder %v385, %v386
    %v388 = vsel %vm387, %v385, %v386
    %vm389 = vcmp.lt.s32.totalorder %v371, %v375
    %v390 = vsel %vm389, %v371, %v375
    %v391 = vrot.slane %v390, 4
    %vm392 = vcmp.lt.s32.totalorder %v390, %v391
    %v393 = vsel %vm392, %v390, %v391
    %v394 = vrot.slane %v393, 2
    %vm395 = vcmp.lt.s32.totalorder %v393, %v394
    %v396 = vsel %vm395, %v393, %v394
    %v397 = vrot.slane %v396, 1
    %vm398 = vcmp.lt.s32.totalorder %v396, %v397
    %v399 = vsel %vm398, %v396, %v397
    %vm400 = vcmp.lt.s32.totalorder %v372, %v376
    %v401 = vsel %vm400, %v372, %v376
    %v402 = vrot.slane %v401, 4
    %vm403 = vcmp.lt.s32.totalorder %v401, %v402
    %v404 = vsel %vm403, %v401, %v402
    %v405 = vrot.slane %v404, 2
    %vm406 = vcmp.lt.s32.totalorder %v404, %v405
    %v407 = vsel %vm406, %v404, %v405
    %v408 = vrot.slane %v407, 1
    %vm409 = vcmp.lt.s32.totalorder %v407, %v408
    %v410 = vsel %vm409, %v407, %v408
    %vm411 = vcmp.lt.s32.totalorder %v373, %v377
    %v412 = vsel %vm411, %v373, %v377
    %v413 = vrot.slane %v412, 4
    %vm414 = vcmp.lt.s32.totalorder %v412, %v413
    %v415 = vsel %vm414, %v412, %v413
    %v416 = vrot.slane %v415, 2
    %vm417 = vcmp.lt.s32.totalorder %v415, %v416
    %v418 = vsel %vm417, %v415, %v416
    %v419 = vrot.slane %v418, 1
    %vm420 = vcmp.lt.s32.totalorder %v418, %v419
    %v421 = vsel %vm420, %v418, %v419
    %vm422 = vcmp.eq.s32.totalorder %v43, %v388
    %vm423 = vcmp.eq.s32.totalorder %v43, %v399
    %vm424 = vcmp.eq.s32.totalorder %v43, %v410
    %vm425 = vcmp.eq.s32.totalorder %v43, %v421
    %vm426 = vcmp.eq.s32.totalorder %v44, %v388
    %vm427 = vcmp.eq.s32.totalorder %v44, %v399
    %vm428 = vcmp.eq.s32.totalorder %v44, %v410
    %vm429 = vcmp.eq.s32.totalorder %v44, %v421
    %v430 = vlaneseq
    %v431 = vshrl.u32 %v430, 7
    %v432 = vsub.s32 0, %v431
    %v433 = vrot.slane %v247, %v432
    %v434 = vlaneseq
    %v435 = vshrl.u32 %v434, 7
    %v436 = vsub.s32 0, %v435
    %v437 = vrot.slane %v249, %v436
    %v438 = vlaneseq
    %v439 = vshrl.u32 %v438, 7
    %v440 = vsub.s32 0, %v439
    %v441 = vrot.slane %v324, %v440
    %v442 = vlaneseq
    %v443 = vshrl.u32 %v442, 7
    %v444 = vsub.s32 0, %v443
    %v445 = vrot.slane %v326, %v444
    %v446 = vsel %vm422, %v433, %v247
    %v447 = vsel %vm423, %v437, %v249
    %v448 = vsel %vm424, %v441, %v324
    %v449 = vsel %vm425, %v445, %v326
    %v450 = vsel %vm426, %v433, %v253
    %v451 = vsel %vm427, %v437, %v255
    %v452 = vsel %vm428, %v441, %v330
    %v453 = vsel %vm429, %v445, %v332
    %v454 = vcombine.low %v388, %v399
    %v455 = vcombine.low %v410, %v421
    %v457 = vunpack.c.l.s4 1983009808
    %v458 = vunpack.c.0.s8 %v457
    %v459 = vlaneseq
    %v460 = vshrl.u32 %v459, 7
    %v461 = vsub.s32 %v458, %v460
    %v462 = vrot.slane %v454, %v461
    %v464 = vunpack.c.l.s4 1983009808
    %v465 = vunpack.c.0.s8 %v464
    %v466 = vlaneseq
    %v467 = vshrl.u32 %v466, 7
    %v468 = vsub.s32 %v465, %v467
    %v469 = vrot.slane %v455, %v468
    %v470 = vcombine.low %v462, %v469
    %vm471 = vcmp.eq.s32.totalorder %v158, %v470
    %vm472 = vcmp.eq.s32.totalorder %v158, 0
    %v473 = vsel %vm472, %v470, %v158
    %v474 = vsel %vm471, 0, %v473
    %vm475 = vcmp.ge.s32.totalorder %v43, 1
    %vm476 = vcmp.ge.s32.totalorder %v44, 1
    %v477 = vsel %vm475, 1, 0
    %v478 = vsel %vm476, 1, 0
    %vm479 = vcmp.eq.s32.totalorder %v477, 1
    %vm480 = vcmp.eq.s32.totalorder %v478, 1
    %v481 = vsel %vm479, %v446, -inf
    %v482 = vsel %vm479, %v447, -inf
    %v483 = vsel %vm479, %v448, -inf
    %v484 = vsel %vm479, %v449, -inf
    %v485 = vsel %vm480, %v450, -inf
    %v486 = vsel %vm480, %v451, -inf
    %v487 = vsel %vm480, %v452, -inf
    %v488 = vsel %vm480, %v453, -inf
    %v489 = vmax.f32 %v481, %v485
    %v490 = vrot.slane %v489, 4
    %v491 = vmax.f32 %v489, %v490
    %v492 = vrot.slane %v491, 2
    %v493 = vmax.f32 %v491, %v492
    %v494 = vrot.slane %v493, 1
    %v495 = vmax.f32 %v493, %v494
    %v496 = vmax.f32 %v482, %v486
    %v497 = vrot.slane %v496, 4
    %v498 = vmax.f32 %v496, %v497
    %v499 = vrot.slane %v498, 2
    %v500 = vmax.f32 %v498, %v499
    %v501 = vrot.slane %v500, 1
    %v502 = vmax.f32 %v500, %v501
    %v503 = vmax.f32 %v483, %v487
    %v504 = vrot.slane %v503, 4
    %v505 = vmax.f32 %v503, %v504
    %v506 = vrot.slane %v505, 2
    %v507 = vmax.f32 %v505, %v506
    %v508 = vrot.slane %v507, 1
    %v509 = vmax.f32 %v507, %v508
    %v510 = vmax.f32 %v484, %v488
    %v511 = vrot.slane %v510, 4
    %v512 = vmax.f32 %v510, %v511
    %v513 = vrot.slane %v512, 2
    %v514 = vmax.f32 %v512, %v513
    %v515 = vrot.slane %v514, 1
    %v516 = vmax.f32 %v514, %v515
    %vm517 = vcmp.eq.f32.partialorder %v481, %v495
    %vm518 = vcmp.eq.f32.partialorder %v482, %v502
    %vm519 = vcmp.eq.f32.partialorder %v483, %v509
    %vm520 = vcmp.eq.f32.partialorder %v484, %v516
    %vm521 = vcmp.eq.f32.partialorder %v485, %v495
    %vm522 = vcmp.eq.f32.partialorder %v486, %v502
    %vm523 = vcmp.eq.f32.partialorder %v487, %v509
    %vm524 = vcmp.eq.f32.partialorder %v488, %v516
    %v525 = vsel %vm517, %v43, 16
    %v526 = vsel %vm518, %v43, 16
    %v527 = vsel %vm519, %v43, 16
    %v528 = vsel %vm520, %v43, 16
    %v529 = vsel %vm521, %v44, 16
    %v530 = vsel %vm522, %v44, 16
    %v531 = vsel %vm523, %v44, 16
    %v532 = vsel %vm524, %v44, 16
    %vm533 = vcmp.lt.s32.totalorder %v525, %v529
    %v534 = vsel %vm533, %v525, %v529
    %v535 = vrot.slane %v534, 4
    %vm536 = vcmp.lt.s32.totalorder %v534, %v535
    %v537 = vsel %vm536, %v534, %v535
    %v538 = vrot.slane %v537, 2
    %vm539 = vcmp.lt.s32.totalorder %v537, %v538
    %v540 = vsel %vm539, %v537, %v538
    %v541 = vrot.slane %v540, 1
    %vm542 = vcmp.lt.s32.totalorder %v540, %v541
    %v543 = vsel %vm542, %v540, %v541
    %vm544 = vcmp.lt.s32.totalorder %v526, %v530
    %v545 = vsel %vm544, %v526, %v530
    %v546 = vrot.slane %v545, 4
    %vm547 = vcmp.lt.s32.totalorder %v545, %v546
    %v548 = vsel %vm547, %v545, %v546
    %v549 = vrot.slane %v548, 2
    %vm550 = vcmp.lt.s32.totalorder %v548, %v549
    %v551 = vsel %vm550, %v548, %v549
    %v552 = vrot.slane %v551, 1
    %vm553 = vcmp.lt.s32.totalorder %v551, %v552
    %v554 = vsel %vm553, %v551, %v552
    %vm555 = vcmp.lt.s32.totalorder %v527, %v531
    %v556 = vsel %vm555, %v527, %v531
    %v557 = vrot.slane %v556, 4
    %vm558 = vcmp.lt.s32.totalorder %v556, %v557
    %v559 = vsel %vm558, %v556, %v557
    %v560 = vrot.slane %v559, 2
    %vm561 = vcmp.lt.s32.totalorder %v559, %v560
    %v562 = vsel %vm561, %v559, %v560
    %v563 = vrot.slane %v562, 1
    %vm564 = vcmp.lt.s32.totalorder %v562, %v563
    %v565 = vsel %vm564, %v562, %v563
    %vm566 = vcmp.lt.s32.totalorder %v528, %v532
    %v567 = vsel %vm566, %v528, %v532
    %v568 = vrot.slane %v567, 4
    %vm569 = vcmp.lt.s32.totalorder %v567, %v568
    %v570 = vsel %vm569, %v567, %v568
    %v571 = vrot.slane %v570, 2
    %vm572 = vcmp.lt.s32.totalorder %v570, %v571
    %v573 = vsel %vm572, %v570, %v571
    %v574 = vrot.slane %v573, 1
    %vm575 = vcmp.lt.s32.totalorder %v573, %v574
    %v576 = vsel %vm575, %v573, %v574
    %vm577 = vcmp.eq.s32.totalorder %v43, %v543
    %vm578 = vcmp.eq.s32.totalorder %v43, %v554
    %vm579 = vcmp.eq.s32.totalorder %v43, %v565
    %vm580 = vcmp.eq.s32.totalorder %v43, %v576
    %vm581 = vcmp.eq.s32.totalorder %v44, %v543
    %vm582 = vcmp.eq.s32.totalorder %v44, %v554
    %vm583 = vcmp.eq.s32.totalorder %v44, %v565
    %vm584 = vcmp.eq.s32.totalorder %v44, %v576
    %v585 = vlaneseq
    %v586 = vshrl.u32 %v585, 7
    %v587 = vsub.s32 1, %v586
    %v588 = vrot.slane %v446, %v587
    %v589 = vlaneseq
    %v590 = vshrl.u32 %v589, 7
    %v591 = vsub.s32 1, %v590
    %v592 = vrot.slane %v447, %v591
    %v593 = vlaneseq
    %v594 = vshrl.u32 %v593, 7
    %v595 = vsub.s32 1, %v594
    %v596 = vrot.slane %v448, %v595
    %v597 = vlaneseq
    %v598 = vshrl.u32 %v597, 7
    %v599 = vsub.s32 1, %v598
    %v600 = vrot.slane %v449, %v599
    %v601 = vsel %vm577, %v588, %v446
    %v602 = vsel %vm578, %v592, %v447
    %v603 = vsel %vm579, %v596, %v448
    %v604 = vsel %vm580, %v600, %v449
    %v605 = vsel %vm581, %v588, %v450
    %v606 = vsel %vm582, %v592, %v451
    %v607 = vsel %vm583, %v596, %v452
    %v608 = vsel %vm584, %v600, %v453
    %v609 = vcombine.low %v543, %v554
    %v610 = vcombine.low %v565, %v576
    %v612 = vunpack.c.l.s4 1983009808
    %v613 = vunpack.c.0.s8 %v612
    %v614 = vlaneseq
    %v615 = vshrl.u32 %v614, 7
    %v616 = vsub.s32 %v613, %v615
    %v617 = vrot.slane %v609, %v616
    %v619 = vunpack.c.l.s4 1983009808
    %v620 = vunpack.c.0.s8 %v619
    %v621 = vlaneseq
    %v622 = vshrl.u32 %v621, 7
    %v623 = vsub.s32 %v620, %v622
    %v624 = vrot.slane %v610, %v623
    %v625 = vcombine.low %v617, %v624
    %vm626 = vcmp.eq.s32.totalorder %v474, %v625
    %vm627 = vcmp.eq.s32.totalorder %v474, 1
    %v628 = vsel %vm627, %v625, %v474
    %v629 = vsel %vm626, 1, %v628
    %vm630 = vcmp.ge.s32.totalorder %v43, 2
    %vm631 = vcmp.ge.s32.totalorder %v44, 2
    %v632 = vsel %vm630, 1, 0
    %v633 = vsel %vm631, 1, 0
    %vm634 = vcmp.eq.s32.totalorder %v632, 1
    %vm635 = vcmp.eq.s32.totalorder %v633, 1
    %v636 = vsel %vm634, %v601, -inf
    %v637 = vsel %vm634, %v602, -inf
    %v638 = vsel %vm634, %v603, -inf
    %v639 = vsel %vm634, %v604, -inf
    %v640 = vsel %vm635, %v605, -inf
    %v641 = vsel %vm635, %v606, -inf
    %v642 = vsel %vm635, %v607, -inf
    %v643 = vsel %vm635, %v608, -inf
    %v644 = vmax.f32 %v636, %v640
    %v645 = vrot.slane %v644, 4
    %v646 = vmax.f32 %v644, %v645
    %v647 = vrot.slane %v646, 2
    %v648 = vmax.f32 %v646, %v647
    %v649 = vrot.slane %v648, 1
    %v650 = vmax.f32 %v648, %v649
    %v651 = vmax.f32 %v637, %v641
    %v652 = vrot.slane %v651, 4
    %v653 = vmax.f32 %v651, %v652
    %v654 = vrot.slane %v653, 2
    %v655 = vmax.f32 %v653, %v654
    %v656 = vrot.slane %v655, 1
    %v657 = vmax.f32 %v655, %v656
    %v658 = vmax.f32 %v638, %v642
    %v659 = vrot.slane %v658, 4
    %v660 = vmax.f32 %v658, %v659
    %v661 = vrot.slane %v660, 2
    %v662 = vmax.f32 %v660, %v661
    %v663 = vrot.slane %v662, 1
    %v664 = vmax.f32 %v662, %v663
    %v665 = vmax.f32 %v639, %v643
    %v666 = vrot.slane %v665, 4
    %v667 = vmax.f32 %v665, %v666
    %v668 = vrot.slane %v667, 2
    %v669 = vmax.f32 %v667, %v668
    %v670 = vrot.slane %v669, 1
    %v671 = vmax.f32 %v669, %v670
    %vm672 = vcmp.eq.f32.partialorder %v636, %v650
    %vm673 = vcmp.eq.f32.partialorder %v637, %v657
    %vm674 = vcmp.eq.f32.partialorder %v638, %v664
    %vm675 = vcmp.eq.f32.partialorder %v639, %v671
    %vm676 = vcmp.eq.f32.partialorder %v640, %v650
    %vm677 = vcmp.eq.f32.partialorder %v641, %v657
    %vm678 = vcmp.eq.f32.partialorder %v642, %v664
    %vm679 = vcmp.eq.f32.partialorder %v643, %v671
    %v680 = vsel %vm672, %v43, 16
    %v681 = vsel %vm673, %v43, 16
    %v682 = vsel %vm674, %v43, 16
    %v683 = vsel %vm675, %v43, 16
    %v684 = vsel %vm676, %v44, 16
    %v685 = vsel %vm677, %v44, 16
    %v686 = vsel %vm678, %v44, 16
    %v687 = vsel %vm679, %v44, 16
    %vm688 = vcmp.lt.s32.totalorder %v680, %v684
    %v689 = vsel %vm688, %v680, %v684
    %v690 = vrot.slane %v689, 4
    %vm691 = vcmp.lt.s32.totalorder %v689, %v690
    %v692 = vsel %vm691, %v689, %v690
    %v693 = vrot.slane %v692, 2
    %vm694 = vcmp.lt.s32.totalorder %v692, %v693
    %v695 = vsel %vm694, %v692, %v693
    %v696 = vrot.slane %v695, 1
    %vm697 = vcmp.lt.s32.totalorder %v695, %v696
    %v698 = vsel %vm697, %v695, %v696
    %vm699 = vcmp.lt.s32.totalorder %v681, %v685
    %v700 = vsel %vm699, %v681, %v685
    %v701 = vrot.slane %v700, 4
    %vm702 = vcmp.lt.s32.totalorder %v700, %v701
    %v703 = vsel %vm702, %v700, %v701
    %v704 = vrot.slane %v703, 2
    %vm705 = vcmp.lt.s32.totalorder %v703, %v704
    %v706 = vsel %vm705, %v703, %v704
    %v707 = vrot.slane %v706, 1
    %vm708 = vcmp.lt.s32.totalorder %v706, %v707
    %v709 = vsel %vm708, %v706, %v707
    %vm710 = vcmp.lt.s32.totalorder %v682, %v686
    %v711 = vsel %vm710, %v682, %v686
    %v712 = vrot.slane %v711, 4
    %vm713 = vcmp.lt.s32.totalorder %v711, %v712
    %v714 = vsel %vm713, %v711, %v712
    %v715 = vrot.slane %v714, 2
    %vm716 = vcmp.lt.s32.totalorder %v714, %v715
    %v717 = vsel %vm716, %v714, %v715
    %v718 = vrot.slane %v717, 1
    %vm719 = vcmp.lt.s32.totalorder %v717, %v718
    %v720 = vsel %vm719, %v717, %v718
    %vm721 = vcmp.lt.s32.totalorder %v683, %v687
    %v722 = vsel %vm721, %v683, %v687
    %v723 = vrot.slane %v722, 4
    %vm724 = vcmp.lt.s32.totalorder %v722, %v723
    %v725 = vsel %vm724, %v722, %v723
    %v726 = vrot.slane %v725, 2
    %vm727 = vcmp.lt.s32.totalorder %v725, %v726
    %v728 = vsel %vm727, %v725, %v726
    %v729 = vrot.slane %v728, 1
    %vm730 = vcmp.lt.s32.totalorder %v728, %v729
    %v731 = vsel %vm730, %v728, %v729
    %vm732 = vcmp.eq.s32.totalorder %v43, %v698
    %vm733 = vcmp.eq.s32.totalorder %v43, %v709
    %vm734 = vcmp.eq.s32.totalorder %v43, %v720
    %vm735 = vcmp.eq.s32.totalorder %v43, %v731
    %vm736 = vcmp.eq.s32.totalorder %v44, %v698
    %vm737 = vcmp.eq.s32.totalorder %v44, %v709
    %vm738 = vcmp.eq.s32.totalorder %v44, %v720
    %vm739 = vcmp.eq.s32.totalorder %v44, %v731
    %v740 = vlaneseq
    %v741 = vshrl.u32 %v740, 7
    %v742 = vsub.s32 2, %v741
    %v743 = vrot.slane %v601, %v742
    %v744 = vlaneseq
    %v745 = vshrl.u32 %v744, 7
    %v746 = vsub.s32 2, %v745
    %v747 = vrot.slane %v602, %v746
    %v748 = vlaneseq
    %v749 = vshrl.u32 %v748, 7
    %v750 = vsub.s32 2, %v749
    %v751 = vrot.slane %v603, %v750
    %v752 = vlaneseq
    %v753 = vshrl.u32 %v752, 7
    %v754 = vsub.s32 2, %v753
    %v755 = vrot.slane %v604, %v754
    %v756 = vsel %vm732, %v743, %v601
    %v757 = vsel %vm733, %v747, %v602
    %v758 = vsel %vm734, %v751, %v603
    %v759 = vsel %vm735, %v755, %v604
    %v760 = vsel %vm736, %v743, %v605
    %v761 = vsel %vm737, %v747, %v606
    %v762 = vsel %vm738, %v751, %v607
    %v763 = vsel %vm739, %v755, %v608
    %v764 = vcombine.low %v698, %v709
    %v765 = vcombine.low %v720, %v731
    %v767 = vunpack.c.l.s4 1983009808
    %v768 = vunpack.c.0.s8 %v767
    %v769 = vlaneseq
    %v770 = vshrl.u32 %v769, 7
    %v771 = vsub.s32 %v768, %v770
    %v772 = vrot.slane %v764, %v771
    %v774 = vunpack.c.l.s4 1983009808
    %v775 = vunpack.c.0.s8 %v774
    %v776 = vlaneseq
    %v777 = vshrl.u32 %v776, 7
    %v778 = vsub.s32 %v775, %v777
    %v779 = vrot.slane %v765, %v778
    %v780 = vcombine.low %v772, %v779
    %vm781 = vcmp.eq.s32.totalorder %v629, %v780
    %vm782 = vcmp.eq.s32.totalorder %v629, 2
    %v783 = vsel %vm782, %v780, %v629
    %v784 = vsel %vm781, 2, %v783
    %vm785 = vcmp.ge.s32.totalorder %v43, 3
    %vm786 = vcmp.ge.s32.totalorder %v44, 3
    %v787 = vsel %vm785, 1, 0
    %v788 = vsel %vm786, 1, 0
    %vm789 = vcmp.eq.s32.totalorder %v787, 1
    %vm790 = vcmp.eq.s32.totalorder %v788, 1
    %v791 = vsel %vm789, %v756, -inf
    %v792 = vsel %vm789, %v757, -inf
    %v793 = vsel %vm789, %v758, -inf
    %v794 = vsel %vm789, %v759, -inf
    %v795 = vsel %vm790, %v760, -inf
    %v796 = vsel %vm790, %v761, -inf
    %v797 = vsel %vm790, %v762, -inf
    %v798 = vsel %vm790, %v763, -inf
    %v799 = vmax.f32 %v791, %v795
    %v800 = vrot.slane %v799, 4
    %v801 = vmax.f32 %v799, %v800
    %v802 = vrot.slane %v801, 2
    %v803 = vmax.f32 %v801, %v802
    %v804 = vrot.slane %v803, 1
    %v805 = vmax.f32 %v803, %v804
    %v806 = vmax.f32 %v792, %v796
    %v807 = vrot.slane %v806, 4
    %v808 = vmax.f32 %v806, %v807
    %v809 = vrot.slane %v808, 2
    %v810 = vmax.f32 %v808, %v809
    %v811 = vrot.slane %v810, 1
    %v812 = vmax.f32 %v810, %v811
    %v813 = vmax.f32 %v793, %v797
    %v814 = vrot.slane %v813, 4
    %v815 = vmax.f32 %v813, %v814
    %v816 = vrot.slane %v815, 2
    %v817 = vmax.f32 %v815, %v816
    %v818 = vrot.slane %v817, 1
    %v819 = vmax.f32 %v817, %v818
    %v820 = vmax.f32 %v794, %v798
    %v821 = vrot.slane %v820, 4
    %v822 = vmax.f32 %v820, %v821
    %v823 = vrot.slane %v822, 2
    %v824 = vmax.f32 %v822, %v823
    %v825 = vrot.slane %v824, 1
    %v826 = vmax.f32 %v824, %v825
    %vm827 = vcmp.eq.f32.partialorder %v791, %v805
    %vm828 = vcmp.eq.f32.partialorder %v792, %v812
    %vm829 = vcmp.eq.f32.partialorder %v793, %v819
    %vm830 = vcmp.eq.f32.partialorder %v794, %v826
    %vm831 = vcmp.eq.f32.partialorder %v795, %v805
    %vm832 = vcmp.eq.f32.partialorder %v796, %v812
    %vm833 = vcmp.eq.f32.partialorder %v797, %v819
    %vm834 = vcmp.eq.f32.partialorder %v798, %v826
    %v835 = vsel %vm827, %v43, 16
    %v836 = vsel %vm828, %v43, 16
    %v837 = vsel %vm829, %v43, 16
    %v838 = vsel %vm830, %v43, 16
    %v839 = vsel %vm831, %v44, 16
    %v840 = vsel %vm832, %v44, 16
    %v841 = vsel %vm833, %v44, 16
    %v842 = vsel %vm834, %v44, 16
    %vm843 = vcmp.lt.s32.totalorder %v835, %v839
    %v844 = vsel %vm843, %v835, %v839
    %v845 = vrot.slane %v844, 4
    %vm846 = vcmp.lt.s32.totalorder %v844, %v845
    %v847 = vsel %vm846, %v844, %v845
    %v848 = vrot.slane %v847, 2
    %vm849 = vcmp.lt.s32.totalorder %v847, %v848
    %v850 = vsel %vm849, %v847, %v848
    %v851 = vrot.slane %v850, 1
    %vm852 = vcmp.lt.s32.totalorder %v850, %v851
    %v853 = vsel %vm852, %v850, %v851
    %vm854 = vcmp.lt.s32.totalorder %v836, %v840
    %v855 = vsel %vm854, %v836, %v840
    %v856 = vrot.slane %v855, 4
    %vm857 = vcmp.lt.s32.totalorder %v855, %v856
    %v858 = vsel %vm857, %v855, %v856
    %v859 = vrot.slane %v858, 2
    %vm860 = vcmp.lt.s32.totalorder %v858, %v859
    %v861 = vsel %vm860, %v858, %v859
    %v862 = vrot.slane %v861, 1
    %vm863 = vcmp.lt.s32.totalorder %v861, %v862
    %v864 = vsel %vm863, %v861, %v862
    %vm865 = vcmp.lt.s32.totalorder %v837, %v841
    %v866 = vsel %vm865, %v837, %v841
    %v867 = vrot.slane %v866, 4
    %vm868 = vcmp.lt.s32.totalorder %v866, %v867
    %v869 = vsel %vm868, %v866, %v867
    %v870 = vrot.slane %v869, 2
    %vm871 = vcmp.lt.s32.totalorder %v869, %v870
    %v872 = vsel %vm871, %v869, %v870
    %v873 = vrot.slane %v872, 1
    %vm874 = vcmp.lt.s32.totalorder %v872, %v873
    %v875 = vsel %vm874, %v872, %v873
    %vm876 = vcmp.lt.s32.totalorder %v838, %v842
    %v877 = vsel %vm876, %v838, %v842
    %v878 = vrot.slane %v877, 4
    %vm879 = vcmp.lt.s32.totalorder %v877, %v878
    %v880 = vsel %vm879, %v877, %v878
    %v881 = vrot.slane %v880, 2
    %vm882 = vcmp.lt.s32.totalorder %v880, %v881
    %v883 = vsel %vm882, %v880, %v881
    %v884 = vrot.slane %v883, 1
    %vm885 = vcmp.lt.s32.totalorder %v883, %v884
    %v886 = vsel %vm885, %v883, %v884
    %v887 = vcombine.low %v853, %v864
    %v888 = vcombine.low %v875, %v886
    %v890 = vunpack.c.l.s4 1983009808
    %v891 = vunpack.c.0.s8 %v890
    %v892 = vlaneseq
    %v893 = vshrl.u32 %v892, 7
    %v894 = vsub.s32 %v891, %v893
    %v895 = vrot.slane %v887, %v894
    %v897 = vunpack.c.l.s4 1983009808
    %v898 = vunpack.c.0.s8 %v897
    %v899 = vlaneseq
    %v900 = vshrl.u32 %v899, 7
    %v901 = vsub.s32 %v898, %v900
    %v902 = vrot.slane %v888, %v901
    %v903 = vcombine.low %v895, %v902
    %vm904 = vcmp.eq.s32.totalorder %v784, %v903
    %vm905 = vcmp.eq.s32.totalorder %v784, 3
    %v906 = vsel %vm905, %v903, %v784
    %v907 = vsel %vm904, 3, %v906
    %v909 = vunpack.c.l.s4 1966171168
    %v910 = vunpack.c.0.s8 %v909
    %v911 = vlaneseq
    %v912 = vshrl.u32 %v911, 7
    %v913 = vsub.s32 %v910, %v912
    %v914 = vrot.slane %v907, %v913
    %v915 = vlaneseq
    %vm916 = vcmp.ge.s32.totalorder %v915, 0
    %vm917 = vcmp.lt.s32.totalorder %v915, 512
    %vm918 = vmand %vm916, %vm917
    %919 = vst.msk [vmem:[#allocation7] ss:$2 sm:$0xf] %vm918, %v914
    %v920 = vld [vmem:[%s1 + $0x10] sm:$0xff]
    %v921 = vld [vmem:[%s1 + $0x18] sm:$0xff]
    %v922 = vld [vmem:[%s2 + $0x10] sm:$0xff]
    %v923 = vld [vmem:[%s2 + $0x18] sm:$0xff]
    %925 = vset.pattern.permute.xlu0 0
    %926 = vperm.xlu0 %925, %v922
    %v927 = vpop.permute.xlu0 %926
    %930 = vset.pattern.permute.xlu0 0
    %931 = vperm.xlu0 %930, %v923
    %v932 = vpop.permute.xlu0 %931
    %v935 = vsel %vm173, %v920, 0
    %v938 = vsel %vm173, %v921, 0
    %940 = vmatprep.subr.mxu0 0.0
    %941 = vmatpush1.msra.mxu0 0.0
    %942 = vmatprep.subr.mxu0 0.0
    %943 = vmatpush1.msra.mxu0 0.0
    %944 = vmatprep.subr.mxu0 0.0
    %945 = vmatpush1.msra.mxu0 0.0
    %946 = vmatprep.subr.mxu0 0.0
    %947 = vmatpush1.msra.mxu0 0.0
    %948 = vmatprep.subr.mxu0 0.0
    %949 = vmatpush1.msra.mxu0 0.0
    %950 = vmatprep.subr.mxu0 0.0
    %951 = vmatpush1.msra.mxu0 0.0
    %952 = vmatprep.subr.mxu0 0.0
    %953 = vmatpush1.msra.mxu0 0.0
    %954 = vmatprep.subr.mxu0 0.0
    %955 = vmatpush1.msra.mxu0 0.0
    %956 = vmatprep.subr.mxu0 0.0
    %957 = vmatpush1.msra.mxu0 0.0
    %958 = vmatprep.subr.mxu0 0.0
    %959 = vmatpush1.msra.mxu0 0.0
    %960 = vmatprep.subr.mxu0 0.0
    %961 = vmatpush1.msra.mxu0 0.0
    %962 = vmatprep.subr.mxu0 0.0
    %963 = vmatpush1.msra.mxu0 0.0
    %964 = vmatprep.subr.mxu0 %v155
    %965 = vmatpush1.msra.mxu0 %v154
    %966 = vmatprep.subr.mxu0 %v151
    %967 = vmatpush1.msra.mxu0 %v150
    %968 = vmatprep.subr.mxu0 %v99
    %969 = vmatpush1.msra.mxu0 %v98
    %970 = vmatprep.subr.mxu0 %v95
    %971 = vmatpush1.msra.mxu0 %v94
    %972 = vmatprep.subr.mxu0 0.0
    %973 = vmatpush2.msra.mxu0 0.0
    %974 = vmatprep.subr.mxu0 0.0
    %975 = vmatpush2.msra.mxu0 0.0
    %976 = vmatprep.subr.mxu0 0.0
    %977 = vmatpush2.msra.mxu0 0.0
    %978 = vmatprep.subr.mxu0 0.0
    %979 = vmatpush2.msra.mxu0 0.0
    %980 = vmatprep.subr.mxu0 0.0
    %981 = vmatpush2.msra.mxu0 0.0
    %982 = vmatprep.subr.mxu0 0.0
    %983 = vmatpush2.msra.mxu0 0.0
    %984 = vmatprep.subr.mxu0 0.0
    %985 = vmatpush2.msra.mxu0 0.0
    %986 = vmatprep.subr.mxu0 0.0
    %987 = vmatpush2.msra.mxu0 0.0
    %988 = vmatprep.subr.mxu0 0.0
    %989 = vmatpush2.msra.mxu0 0.0
    %990 = vmatprep.subr.mxu0 0.0
    %991 = vmatpush2.msra.mxu0 0.0
    %992 = vmatprep.subr.mxu0 0.0
    %993 = vmatpush2.msra.mxu0 0.0
    %994 = vmatprep.subr.mxu0 0.0
    %995 = vmatpush2.msra.mxu0 0.0
    %996 = vmatprep.subr.mxu0 0.0
    %997 = vmatpush2.msra.mxu0 0.0
    %998 = vmatprep.subr.mxu0 0.0
    %999 = vmatpush2.msra.mxu0 0.0
    %1000 = vmatprep.subr.mxu0 0.0
    %1001 = vmatpush2.msra.mxu0 0.0
    %1002 = vmatprep.subr.mxu0 0.0
    %1003 = vmatpush2.msra.mxu0 0.0
    %1004 = vmatprep.mubr.f32.mxu0 0.0
    %1005 = vmatmul.mubr.f32.gmra.mxu0 %v935
    %v1006 = vpop.f32.mrf.mxu0
    %v1007 = vadd.f32 %v927, %v1006
    %v1008 = vpop.f32.mrf.mxu0
    %v1009 = vadd.f32 %v927, %v1008
    %1010 = vmatprep.mubr.f32.mxu0 0.0
    %1011 = vmatmul.mubr.f32.gmra.mxu0 %v938
    %v1012 = vpop.f32.mrf.mxu0
    %v1013 = vadd.f32 %v932, %v1012
    %v1014 = vpop.f32.mrf.mxu0
    %v1015 = vadd.f32 %v932, %v1014
    %1016 = vdwg.mxu0
    %1017 = vmatprep.subr.mxu0 0.0
    %1018 = vmatpush1.msra.mxu0 0.0
    %1019 = vmatprep.subr.mxu0 0.0
    %1020 = vmatpush1.msra.mxu0 0.0
    %1021 = vmatprep.subr.mxu0 0.0
    %1022 = vmatpush1.msra.mxu0 0.0
    %1023 = vmatprep.subr.mxu0 0.0
    %1024 = vmatpush1.msra.mxu0 0.0
    %1025 = vmatprep.subr.mxu0 0.0
    %1026 = vmatpush1.msra.mxu0 0.0
    %1027 = vmatprep.subr.mxu0 0.0
    %1028 = vmatpush1.msra.mxu0 0.0
    %1029 = vmatprep.subr.mxu0 0.0
    %1030 = vmatpush1.msra.mxu0 0.0
    %1031 = vmatprep.subr.mxu0 0.0
    %1032 = vmatpush1.msra.mxu0 0.0
    %1033 = vmatprep.subr.mxu0 0.0
    %1034 = vmatpush1.msra.mxu0 0.0
    %1035 = vmatprep.subr.mxu0 0.0
    %1036 = vmatpush1.msra.mxu0 0.0
    %1037 = vmatprep.subr.mxu0 0.0
    %1038 = vmatpush1.msra.mxu0 0.0
    %1039 = vmatprep.subr.mxu0 0.0
    %1040 = vmatpush1.msra.mxu0 0.0
    %1041 = vmatprep.subr.mxu0 %v157
    %1042 = vmatpush1.msra.mxu0 %v156
    %1043 = vmatprep.subr.mxu0 %v153
    %1044 = vmatpush1.msra.mxu0 %v152
    %1045 = vmatprep.subr.mxu0 %v101
    %1046 = vmatpush1.msra.mxu0 %v100
    %1047 = vmatprep.subr.mxu0 %v97
    %1048 = vmatpush1.msra.mxu0 %v96
    %1049 = vmatprep.subr.mxu0 0.0
    %1050 = vmatpush2.msra.mxu0 0.0
    %1051 = vmatprep.subr.mxu0 0.0
    %1052 = vmatpush2.msra.mxu0 0.0
    %1053 = vmatprep.subr.mxu0 0.0
    %1054 = vmatpush2.msra.mxu0 0.0
    %1055 = vmatprep.subr.mxu0 0.0
    %1056 = vmatpush2.msra.mxu0 0.0
    %1057 = vmatprep.subr.mxu0 0.0
    %1058 = vmatpush2.msra.mxu0 0.0
    %1059 = vmatprep.subr.mxu0 0.0
    %1060 = vmatpush2.msra.mxu0 0.0
    %1061 = vmatprep.subr.mxu0 0.0
    %1062 = vmatpush2.msra.mxu0 0.0
    %1063 = vmatprep.subr.mxu0 0.0
    %1064 = vmatpush2.msra.mxu0 0.0
    %1065 = vmatprep.subr.mxu0 0.0
    %1066 = vmatpush2.msra.mxu0 0.0
    %1067 = vmatprep.subr.mxu0 0.0
    %1068 = vmatpush2.msra.mxu0 0.0
    %1069 = vmatprep.subr.mxu0 0.0
    %1070 = vmatpush2.msra.mxu0 0.0
    %1071 = vmatprep.subr.mxu0 0.0
    %1072 = vmatpush2.msra.mxu0 0.0
    %1073 = vmatprep.subr.mxu0 0.0
    %1074 = vmatpush2.msra.mxu0 0.0
    %1075 = vmatprep.subr.mxu0 0.0
    %1076 = vmatpush2.msra.mxu0 0.0
    %1077 = vmatprep.subr.mxu0 0.0
    %1078 = vmatpush2.msra.mxu0 0.0
    %1079 = vmatprep.subr.mxu0 0.0
    %1080 = vmatpush2.msra.mxu0 0.0
    %1081 = vmatprep.mubr.f32.mxu0 0.0
    %1082 = vmatmul.mubr.f32.gmra.mxu0 %v935
    %v1083 = vpop.f32.mrf.mxu0
    %v1084 = vadd.f32 %v927, %v1083
    %v1085 = vpop.f32.mrf.mxu0
    %v1086 = vadd.f32 %v927, %v1085
    %1087 = vmatprep.mubr.f32.mxu0 0.0
    %1088 = vmatmul.mubr.f32.gmra.mxu0 %v938
    %v1089 = vpop.f32.mrf.mxu0
    %v1090 = vadd.f32 %v932, %v1089
    %v1091 = vpop.f32.mrf.mxu0
    %v1092 = vadd.f32 %v932, %v1091
    %1093 = vdwg.mxu0
    %v1094 = vmax.f32 %v1007, %v1013
    %v1095 = vrot.slane %v1094, 4
    %v1096 = vmax.f32 %v1094, %v1095
    %v1097 = vrot.slane %v1096, 2
    %v1098 = vmax.f32 %v1096, %v1097
    %v1099 = vrot.slane %v1098, 1
    %v1100 = vmax.f32 %v1098, %v1099
    %v1101 = vmax.f32 %v1009, %v1015
    %v1102 = vrot.slane %v1101, 4
    %v1103 = vmax.f32 %v1101, %v1102
    %v1104 = vrot.slane %v1103, 2
    %v1105 = vmax.f32 %v1103, %v1104
    %v1106 = vrot.slane %v1105, 1
    %v1107 = vmax.f32 %v1105, %v1106
    %v1108 = vmax.f32 %v1084, %v1090
    %v1109 = vrot.slane %v1108, 4
    %v1110 = vmax.f32 %v1108, %v1109
    %v1111 = vrot.slane %v1110, 2
    %v1112 = vmax.f32 %v1110, %v1111
    %v1113 = vrot.slane %v1112, 1
    %v1114 = vmax.f32 %v1112, %v1113
    %v1115 = vmax.f32 %v1086, %v1092
    %v1116 = vrot.slane %v1115, 4
    %v1117 = vmax.f32 %v1115, %v1116
    %v1118 = vrot.slane %v1117, 2
    %v1119 = vmax.f32 %v1117, %v1118
    %v1120 = vrot.slane %v1119, 1
    %v1121 = vmax.f32 %v1119, %v1120
    %vm1122 = vcmp.eq.f32.partialorder %v1007, %v1100
    %vm1123 = vcmp.eq.f32.partialorder %v1009, %v1107
    %vm1124 = vcmp.eq.f32.partialorder %v1084, %v1114
    %vm1125 = vcmp.eq.f32.partialorder %v1086, %v1121
    %vm1126 = vcmp.eq.f32.partialorder %v1013, %v1100
    %vm1127 = vcmp.eq.f32.partialorder %v1015, %v1107
    %vm1128 = vcmp.eq.f32.partialorder %v1090, %v1114
    %vm1129 = vcmp.eq.f32.partialorder %v1092, %v1121
    %v1130 = vsel %vm1122, %v43, 16
    %v1131 = vsel %vm1123, %v43, 16
    %v1132 = vsel %vm1124, %v43, 16
    %v1133 = vsel %vm1125, %v43, 16
    %v1134 = vsel %vm1126, %v44, 16
    %v1135 = vsel %vm1127, %v44, 16
    %v1136 = vsel %vm1128, %v44, 16
    %v1137 = vsel %vm1129, %v44, 16
    %vm1138 = vcmp.lt.s32.totalorder %v1130, %v1134
    %v1139 = vsel %vm1138, %v1130, %v1134
    %v1140 = vrot.slane %v1139, 4
    %vm1141 = vcmp.lt.s32.totalorder %v1139, %v1140
    %v1142 = vsel %vm1141, %v1139, %v1140
    %v1143 = vrot.slane %v1142, 2
    %vm1144 = vcmp.lt.s32.totalorder %v1142, %v1143
    %v1145 = vsel %vm1144, %v1142, %v1143
    %v1146 = vrot.slane %v1145, 1
    %vm1147 = vcmp.lt.s32.totalorder %v1145, %v1146
    %v1148 = vsel %vm1147, %v1145, %v1146
    %vm1149 = vcmp.lt.s32.totalorder %v1131, %v1135
    %v1150 = vsel %vm1149, %v1131, %v1135
    %v1151 = vrot.slane %v1150, 4
    %vm1152 = vcmp.lt.s32.totalorder %v1150, %v1151
    %v1153 = vsel %vm1152, %v1150, %v1151
    %v1154 = vrot.slane %v1153, 2
    %vm1155 = vcmp.lt.s32.totalorder %v1153, %v1154
    %v1156 = vsel %vm1155, %v1153, %v1154
    %v1157 = vrot.slane %v1156, 1
    %vm1158 = vcmp.lt.s32.totalorder %v1156, %v1157
    %v1159 = vsel %vm1158, %v1156, %v1157
    %vm1160 = vcmp.lt.s32.totalorder %v1132, %v1136
    %v1161 = vsel %vm1160, %v1132, %v1136
    %v1162 = vrot.slane %v1161, 4
    %vm1163 = vcmp.lt.s32.totalorder %v1161, %v1162
    %v1164 = vsel %vm1163, %v1161, %v1162
    %v1165 = vrot.slane %v1164, 2
    %vm1166 = vcmp.lt.s32.totalorder %v1164, %v1165
    %v1167 = vsel %vm1166, %v1164, %v1165
    %v1168 = vrot.slane %v1167, 1
    %vm1169 = vcmp.lt.s32.totalorder %v1167, %v1168
    %v1170 = vsel %vm1169, %v1167, %v1168
    %vm1171 = vcmp.lt.s32.totalorder %v1133, %v1137
    %v1172 = vsel %vm1171, %v1133, %v1137
    %v1173 = vrot.slane %v1172, 4
    %vm1174 = vcmp.lt.s32.totalorder %v1172, %v1173
    %v1175 = vsel %vm1174, %v1172, %v1173
    %v1176 = vrot.slane %v1175, 2
    %vm1177 = vcmp.lt.s32.totalorder %v1175, %v1176
    %v1178 = vsel %vm1177, %v1175, %v1176
    %v1179 = vrot.slane %v1178, 1
    %vm1180 = vcmp.lt.s32.totalorder %v1178, %v1179
    %v1181 = vsel %vm1180, %v1178, %v1179
    %vm1182 = vcmp.eq.s32.totalorder %v43, %v1148
    %vm1183 = vcmp.eq.s32.totalorder %v43, %v1159
    %vm1184 = vcmp.eq.s32.totalorder %v43, %v1170
    %vm1185 = vcmp.eq.s32.totalorder %v43, %v1181
    %vm1186 = vcmp.eq.s32.totalorder %v44, %v1148
    %vm1187 = vcmp.eq.s32.totalorder %v44, %v1159
    %vm1188 = vcmp.eq.s32.totalorder %v44, %v1170
    %vm1189 = vcmp.eq.s32.totalorder %v44, %v1181
    %v1190 = vlaneseq
    %v1191 = vshrl.u32 %v1190, 7
    %v1192 = vsub.s32 0, %v1191
    %v1193 = vrot.slane %v1007, %v1192
    %v1194 = vlaneseq
    %v1195 = vshrl.u32 %v1194, 7
    %v1196 = vsub.s32 0, %v1195
    %v1197 = vrot.slane %v1009, %v1196
    %v1198 = vlaneseq
    %v1199 = vshrl.u32 %v1198, 7
    %v1200 = vsub.s32 0, %v1199
    %v1201 = vrot.slane %v1084, %v1200
    %v1202 = vlaneseq
    %v1203 = vshrl.u32 %v1202, 7
    %v1204 = vsub.s32 0, %v1203
    %v1205 = vrot.slane %v1086, %v1204
    %v1206 = vsel %vm1182, %v1193, %v1007
    %v1207 = vsel %vm1183, %v1197, %v1009
    %v1208 = vsel %vm1184, %v1201, %v1084
    %v1209 = vsel %vm1185, %v1205, %v1086
    %v1210 = vsel %vm1186, %v1193, %v1013
    %v1211 = vsel %vm1187, %v1197, %v1015
    %v1212 = vsel %vm1188, %v1201, %v1090
    %v1213 = vsel %vm1189, %v1205, %v1092
    %v1214 = vcombine.low %v1148, %v1159
    %v1215 = vcombine.low %v1170, %v1181
    %v1217 = vunpack.c.l.s4 1983009808
    %v1218 = vunpack.c.0.s8 %v1217
    %v1219 = vlaneseq
    %v1220 = vshrl.u32 %v1219, 7
    %v1221 = vsub.s32 %v1218, %v1220
    %v1222 = vrot.slane %v1214, %v1221
    %v1224 = vunpack.c.l.s4 1983009808
    %v1225 = vunpack.c.0.s8 %v1224
    %v1226 = vlaneseq
    %v1227 = vshrl.u32 %v1226, 7
    %v1228 = vsub.s32 %v1225, %v1227
    %v1229 = vrot.slane %v1215, %v1228
    %v1230 = vcombine.low %v1222, %v1229
    %v1231 = vrot.slane %v1230, 7
    %vm1232 = vcmp.eq.s32.totalorder %v158, %v1231
    %v1233 = vsel %vm472, %v1231, %v158
    %v1234 = vsel %vm1232, 0, %v1233
    %v1235 = vsel %vm479, %v1206, -inf
    %v1236 = vsel %vm479, %v1207, -inf
    %v1237 = vsel %vm479, %v1208, -inf
    %v1238 = vsel %vm479, %v1209, -inf
    %v1239 = vsel %vm480, %v1210, -inf
    %v1240 = vsel %vm480, %v1211, -inf
    %v1241 = vsel %vm480, %v1212, -inf
    %v1242 = vsel %vm480, %v1213, -inf
    %v1243 = vmax.f32 %v1235, %v1239
    %v1244 = vrot.slane %v1243, 4
    %v1245 = vmax.f32 %v1243, %v1244
    %v1246 = vrot.slane %v1245, 2
    %v1247 = vmax.f32 %v1245, %v1246
    %v1248 = vrot.slane %v1247, 1
    %v1249 = vmax.f32 %v1247, %v1248
    %v1250 = vmax.f32 %v1236, %v1240
    %v1251 = vrot.slane %v1250, 4
    %v1252 = vmax.f32 %v1250, %v1251
    %v1253 = vrot.slane %v1252, 2
    %v1254 = vmax.f32 %v1252, %v1253
    %v1255 = vrot.slane %v1254, 1
    %v1256 = vmax.f32 %v1254, %v1255
    %v1257 = vmax.f32 %v1237, %v1241
    %v1258 = vrot.slane %v1257, 4
    %v1259 = vmax.f32 %v1257, %v1258
    %v1260 = vrot.slane %v1259, 2
    %v1261 = vmax.f32 %v1259, %v1260
    %v1262 = vrot.slane %v1261, 1
    %v1263 = vmax.f32 %v1261, %v1262
    %v1264 = vmax.f32 %v1238, %v1242
    %v1265 = vrot.slane %v1264, 4
    %v1266 = vmax.f32 %v1264, %v1265
    %v1267 = vrot.slane %v1266, 2
    %v1268 = vmax.f32 %v1266, %v1267
    %v1269 = vrot.slane %v1268, 1
    %v1270 = vmax.f32 %v1268, %v1269
    %vm1271 = vcmp.eq.f32.partialorder %v1235, %v1249
    %vm1272 = vcmp.eq.f32.partialorder %v1236, %v1256
    %vm1273 = vcmp.eq.f32.partialorder %v1237, %v1263
    %vm1274 = vcmp.eq.f32.partialorder %v1238, %v1270
    %vm1275 = vcmp.eq.f32.partialorder %v1239, %v1249
    %vm1276 = vcmp.eq.f32.partialorder %v1240, %v1256
    %vm1277 = vcmp.eq.f32.partialorder %v1241, %v1263
    %vm1278 = vcmp.eq.f32.partialorder %v1242, %v1270
    %v1279 = vsel %vm1271, %v43, 16
    %v1280 = vsel %vm1272, %v43, 16
    %v1281 = vsel %vm1273, %v43, 16
    %v1282 = vsel %vm1274, %v43, 16
    %v1283 = vsel %vm1275, %v44, 16
    %v1284 = vsel %vm1276, %v44, 16
    %v1285 = vsel %vm1277, %v44, 16
    %v1286 = vsel %vm1278, %v44, 16
    %vm1287 = vcmp.lt.s32.totalorder %v1279, %v1283
    %v1288 = vsel %vm1287, %v1279, %v1283
    %v1289 = vrot.slane %v1288, 4
    %vm1290 = vcmp.lt.s32.totalorder %v1288, %v1289
    %v1291 = vsel %vm1290, %v1288, %v1289
    %v1292 = vrot.slane %v1291, 2
    %vm1293 = vcmp.lt.s32.totalorder %v1291, %v1292
    %v1294 = vsel %vm1293, %v1291, %v1292
    %v1295 = vrot.slane %v1294, 1
    %vm1296 = vcmp.lt.s32.totalorder %v1294, %v1295
    %v1297 = vsel %vm1296, %v1294, %v1295
    %vm1298 = vcmp.lt.s32.totalorder %v1280, %v1284
    %v1299 = vsel %vm1298, %v1280, %v1284
    %v1300 = vrot.slane %v1299, 4
    %vm1301 = vcmp.lt.s32.totalorder %v1299, %v1300
    %v1302 = vsel %vm1301, %v1299, %v1300
    %v1303 = vrot.slane %v1302, 2
    %vm1304 = vcmp.lt.s32.totalorder %v1302, %v1303
    %v1305 = vsel %vm1304, %v1302, %v1303
    %v1306 = vrot.slane %v1305, 1
    %vm1307 = vcmp.lt.s32.totalorder %v1305, %v1306
    %v1308 = vsel %vm1307, %v1305, %v1306
    %vm1309 = vcmp.lt.s32.totalorder %v1281, %v1285
    %v1310 = vsel %vm1309, %v1281, %v1285
    %v1311 = vrot.slane %v1310, 4
    %vm1312 = vcmp.lt.s32.totalorder %v1310, %v1311
    %v1313 = vsel %vm1312, %v1310, %v1311
    %v1314 = vrot.slane %v1313, 2
    %vm1315 = vcmp.lt.s32.totalorder %v1313, %v1314
    %v1316 = vsel %vm1315, %v1313, %v1314
    %v1317 = vrot.slane %v1316, 1
    %vm1318 = vcmp.lt.s32.totalorder %v1316, %v1317
    %v1319 = vsel %vm1318, %v1316, %v1317
    %vm1320 = vcmp.lt.s32.totalorder %v1282, %v1286
    %v1321 = vsel %vm1320, %v1282, %v1286
    %v1322 = vrot.slane %v1321, 4
    %vm1323 = vcmp.lt.s32.totalorder %v1321, %v1322
    %v1324 = vsel %vm1323, %v1321, %v1322
    %v1325 = vrot.slane %v1324, 2
    %vm1326 = vcmp.lt.s32.totalorder %v1324, %v1325
    %v1327 = vsel %vm1326, %v1324, %v1325
    %v1328 = vrot.slane %v1327, 1
    %vm1329 = vcmp.lt.s32.totalorder %v1327, %v1328
    %v1330 = vsel %vm1329, %v1327, %v1328
    %vm1331 = vcmp.eq.s32.totalorder %v43, %v1297
    %vm1332 = vcmp.eq.s32.totalorder %v43, %v1308
    %vm1333 = vcmp.eq.s32.totalorder %v43, %v1319
    %vm1334 = vcmp.eq.s32.totalorder %v43, %v1330
    %vm1335 = vcmp.eq.s32.totalorder %v44, %v1297
    %vm1336 = vcmp.eq.s32.totalorder %v44, %v1308
    %vm1337 = vcmp.eq.s32.totalorder %v44, %v1319
    %vm1338 = vcmp.eq.s32.totalorder %v44, %v1330
    %v1339 = vlaneseq
    %v1340 = vshrl.u32 %v1339, 7
    %v1341 = vsub.s32 1, %v1340
    %v1342 = vrot.slane %v1206, %v1341
    %v1343 = vlaneseq
    %v1344 = vshrl.u32 %v1343, 7
    %v1345 = vsub.s32 1, %v1344
    %v1346 = vrot.slane %v1207, %v1345
    %v1347 = vlaneseq
    %v1348 = vshrl.u32 %v1347, 7
    %v1349 = vsub.s32 1, %v1348
    %v1350 = vrot.slane %v1208, %v1349
    %v1351 = vlaneseq
    %v1352 = vshrl.u32 %v1351, 7
    %v1353 = vsub.s32 1, %v1352
    %v1354 = vrot.slane %v1209, %v1353
    %v1355 = vsel %vm1331, %v1342, %v1206
    %v1356 = vsel %vm1332, %v1346, %v1207
    %v1357 = vsel %vm1333, %v1350, %v1208
    %v1358 = vsel %vm1334, %v1354, %v1209
    %v1359 = vsel %vm1335, %v1342, %v1210
    %v1360 = vsel %vm1336, %v1346, %v1211
    %v1361 = vsel %vm1337, %v1350, %v1212
    %v1362 = vsel %vm1338, %v1354, %v1213
    %v1363 = vcombine.low %v1297, %v1308
    %v1364 = vcombine.low %v1319, %v1330
    %v1366 = vunpack.c.l.s4 1983009808
    %v1367 = vunpack.c.0.s8 %v1366
    %v1368 = vlaneseq
    %v1369 = vshrl.u32 %v1368, 7
    %v1370 = vsub.s32 %v1367, %v1369
    %v1371 = vrot.slane %v1363, %v1370
    %v1373 = vunpack.c.l.s4 1983009808
    %v1374 = vunpack.c.0.s8 %v1373
    %v1375 = vlaneseq
    %v1376 = vshrl.u32 %v1375, 7
    %v1377 = vsub.s32 %v1374, %v1376
    %v1378 = vrot.slane %v1364, %v1377
    %v1379 = vcombine.low %v1371, %v1378
    %v1380 = vrot.slane %v1379, 7
    %vm1381 = vcmp.eq.s32.totalorder %v1234, %v1380
    %vm1382 = vcmp.eq.s32.totalorder %v1234, 1
    %v1383 = vsel %vm1382, %v1380, %v1234
    %v1384 = vsel %vm1381, 1, %v1383
    %v1385 = vsel %vm634, %v1355, -inf
    %v1386 = vsel %vm634, %v1356, -inf
    %v1387 = vsel %vm634, %v1357, -inf
    %v1388 = vsel %vm634, %v1358, -inf
    %v1389 = vsel %vm635, %v1359, -inf
    %v1390 = vsel %vm635, %v1360, -inf
    %v1391 = vsel %vm635, %v1361, -inf
    %v1392 = vsel %vm635, %v1362, -inf
    %v1393 = vmax.f32 %v1385, %v1389
    %v1394 = vrot.slane %v1393, 4
    %v1395 = vmax.f32 %v1393, %v1394
    %v1396 = vrot.slane %v1395, 2
    %v1397 = vmax.f32 %v1395, %v1396
    %v1398 = vrot.slane %v1397, 1
    %v1399 = vmax.f32 %v1397, %v1398
    %v1400 = vmax.f32 %v1386, %v1390
    %v1401 = vrot.slane %v1400, 4
    %v1402 = vmax.f32 %v1400, %v1401
    %v1403 = vrot.slane %v1402, 2
    %v1404 = vmax.f32 %v1402, %v1403
    %v1405 = vrot.slane %v1404, 1
    %v1406 = vmax.f32 %v1404, %v1405
    %v1407 = vmax.f32 %v1387, %v1391
    %v1408 = vrot.slane %v1407, 4
    %v1409 = vmax.f32 %v1407, %v1408
    %v1410 = vrot.slane %v1409, 2
    %v1411 = vmax.f32 %v1409, %v1410
    %v1412 = vrot.slane %v1411, 1
    %v1413 = vmax.f32 %v1411, %v1412
    %v1414 = vmax.f32 %v1388, %v1392
    %v1415 = vrot.slane %v1414, 4
    %v1416 = vmax.f32 %v1414, %v1415
    %v1417 = vrot.slane %v1416, 2
    %v1418 = vmax.f32 %v1416, %v1417
    %v1419 = vrot.slane %v1418, 1
    %v1420 = vmax.f32 %v1418, %v1419
    %vm1421 = vcmp.eq.f32.partialorder %v1385, %v1399
    %vm1422 = vcmp.eq.f32.partialorder %v1386, %v1406
    %vm1423 = vcmp.eq.f32.partialorder %v1387, %v1413
    %vm1424 = vcmp.eq.f32.partialorder %v1388, %v1420
    %vm1425 = vcmp.eq.f32.partialorder %v1389, %v1399
    %vm1426 = vcmp.eq.f32.partialorder %v1390, %v1406
    %vm1427 = vcmp.eq.f32.partialorder %v1391, %v1413
    %vm1428 = vcmp.eq.f32.partialorder %v1392, %v1420
    %v1429 = vsel %vm1421, %v43, 16
    %v1430 = vsel %vm1422, %v43, 16
    %v1431 = vsel %vm1423, %v43, 16
    %v1432 = vsel %vm1424, %v43, 16
    %v1433 = vsel %vm1425, %v44, 16
    %v1434 = vsel %vm1426, %v44, 16
    %v1435 = vsel %vm1427, %v44, 16
    %v1436 = vsel %vm1428, %v44, 16
    %vm1437 = vcmp.lt.s32.totalorder %v1429, %v1433
    %v1438 = vsel %vm1437, %v1429, %v1433
    %v1439 = vrot.slane %v1438, 4
    %vm1440 = vcmp.lt.s32.totalorder %v1438, %v1439
    %v1441 = vsel %vm1440, %v1438, %v1439
    %v1442 = vrot.slane %v1441, 2
    %vm1443 = vcmp.lt.s32.totalorder %v1441, %v1442
    %v1444 = vsel %vm1443, %v1441, %v1442
    %v1445 = vrot.slane %v1444, 1
    %vm1446 = vcmp.lt.s32.totalorder %v1444, %v1445
    %v1447 = vsel %vm1446, %v1444, %v1445
    %vm1448 = vcmp.lt.s32.totalorder %v1430, %v1434
    %v1449 = vsel %vm1448, %v1430, %v1434
    %v1450 = vrot.slane %v1449, 4
    %vm1451 = vcmp.lt.s32.totalorder %v1449, %v1450
    %v1452 = vsel %vm1451, %v1449, %v1450
    %v1453 = vrot.slane %v1452, 2
    %vm1454 = vcmp.lt.s32.totalorder %v1452, %v1453
    %v1455 = vsel %vm1454, %v1452, %v1453
    %v1456 = vrot.slane %v1455, 1
    %vm1457 = vcmp.lt.s32.totalorder %v1455, %v1456
    %v1458 = vsel %vm1457, %v1455, %v1456
    %vm1459 = vcmp.lt.s32.totalorder %v1431, %v1435
    %v1460 = vsel %vm1459, %v1431, %v1435
    %v1461 = vrot.slane %v1460, 4
    %vm1462 = vcmp.lt.s32.totalorder %v1460, %v1461
    %v1463 = vsel %vm1462, %v1460, %v1461
    %v1464 = vrot.slane %v1463, 2
    %vm1465 = vcmp.lt.s32.totalorder %v1463, %v1464
    %v1466 = vsel %vm1465, %v1463, %v1464
    %v1467 = vrot.slane %v1466, 1
    %vm1468 = vcmp.lt.s32.totalorder %v1466, %v1467
    %v1469 = vsel %vm1468, %v1466, %v1467
    %vm1470 = vcmp.lt.s32.totalorder %v1432, %v1436
    %v1471 = vsel %vm1470, %v1432, %v1436
    %v1472 = vrot.slane %v1471, 4
    %vm1473 = vcmp.lt.s32.totalorder %v1471, %v1472
    %v1474 = vsel %vm1473, %v1471, %v1472
    %v1475 = vrot.slane %v1474, 2
    %vm1476 = vcmp.lt.s32.totalorder %v1474, %v1475
    %v1477 = vsel %vm1476, %v1474, %v1475
    %v1478 = vrot.slane %v1477, 1
    %vm1479 = vcmp.lt.s32.totalorder %v1477, %v1478
    %v1480 = vsel %vm1479, %v1477, %v1478
    %vm1481 = vcmp.eq.s32.totalorder %v43, %v1447
    %vm1482 = vcmp.eq.s32.totalorder %v43, %v1458
    %vm1483 = vcmp.eq.s32.totalorder %v43, %v1469
    %vm1484 = vcmp.eq.s32.totalorder %v43, %v1480
    %vm1485 = vcmp.eq.s32.totalorder %v44, %v1447
    %vm1486 = vcmp.eq.s32.totalorder %v44, %v1458
    %vm1487 = vcmp.eq.s32.totalorder %v44, %v1469
    %vm1488 = vcmp.eq.s32.totalorder %v44, %v1480
    %v1489 = vlaneseq
    %v1490 = vshrl.u32 %v1489, 7
    %v1491 = vsub.s32 2, %v1490
    %v1492 = vrot.slane %v1355, %v1491
    %v1493 = vlaneseq
    %v1494 = vshrl.u32 %v1493, 7
    %v1495 = vsub.s32 2, %v1494
    %v1496 = vrot.slane %v1356, %v1495
    %v1497 = vlaneseq
    %v1498 = vshrl.u32 %v1497, 7
    %v1499 = vsub.s32 2, %v1498
    %v1500 = vrot.slane %v1357, %v1499
    %v1501 = vlaneseq
    %v1502 = vshrl.u32 %v1501, 7
    %v1503 = vsub.s32 2, %v1502
    %v1504 = vrot.slane %v1358, %v1503
    %v1505 = vsel %vm1481, %v1492, %v1355
    %v1506 = vsel %vm1482, %v1496, %v1356
    %v1507 = vsel %vm1483, %v1500, %v1357
    %v1508 = vsel %vm1484, %v1504, %v1358
    %v1509 = vsel %vm1485, %v1492, %v1359
    %v1510 = vsel %vm1486, %v1496, %v1360
    %v1511 = vsel %vm1487, %v1500, %v1361
    %v1512 = vsel %vm1488, %v1504, %v1362
    %v1513 = vcombine.low %v1447, %v1458
    %v1514 = vcombine.low %v1469, %v1480
    %v1516 = vunpack.c.l.s4 1983009808
    %v1517 = vunpack.c.0.s8 %v1516
    %v1518 = vlaneseq
    %v1519 = vshrl.u32 %v1518, 7
    %v1520 = vsub.s32 %v1517, %v1519
    %v1521 = vrot.slane %v1513, %v1520
    %v1523 = vunpack.c.l.s4 1983009808
    %v1524 = vunpack.c.0.s8 %v1523
    %v1525 = vlaneseq
    %v1526 = vshrl.u32 %v1525, 7
    %v1527 = vsub.s32 %v1524, %v1526
    %v1528 = vrot.slane %v1514, %v1527
    %v1529 = vcombine.low %v1521, %v1528
    %v1530 = vrot.slane %v1529, 7
    %vm1531 = vcmp.eq.s32.totalorder %v1384, %v1530
    %vm1532 = vcmp.eq.s32.totalorder %v1384, 2
    %v1533 = vsel %vm1532, %v1530, %v1384
    %v1534 = vsel %vm1531, 2, %v1533
    %v1535 = vsel %vm789, %v1505, -inf
    %v1536 = vsel %vm789, %v1506, -inf
    %v1537 = vsel %vm789, %v1507, -inf
    %v1538 = vsel %vm789, %v1508, -inf
    %v1539 = vsel %vm790, %v1509, -inf
    %v1540 = vsel %vm790, %v1510, -inf
    %v1541 = vsel %vm790, %v1511, -inf
    %v1542 = vsel %vm790, %v1512, -inf
    %v1543 = vmax.f32 %v1535, %v1539
    %v1544 = vrot.slane %v1543, 4
    %v1545 = vmax.f32 %v1543, %v1544
    %v1546 = vrot.slane %v1545, 2
    %v1547 = vmax.f32 %v1545, %v1546
    %v1548 = vrot.slane %v1547, 1
    %v1549 = vmax.f32 %v1547, %v1548
    %v1550 = vmax.f32 %v1536, %v1540
    %v1551 = vrot.slane %v1550, 4
    %v1552 = vmax.f32 %v1550, %v1551
    %v1553 = vrot.slane %v1552, 2
    %v1554 = vmax.f32 %v1552, %v1553
    %v1555 = vrot.slane %v1554, 1
    %v1556 = vmax.f32 %v1554, %v1555
    %v1557 = vmax.f32 %v1537, %v1541
    %v1558 = vrot.slane %v1557, 4
    %v1559 = vmax.f32 %v1557, %v1558
    %v1560 = vrot.slane %v1559, 2
    %v1561 = vmax.f32 %v1559, %v1560
    %v1562 = vrot.slane %v1561, 1
    %v1563 = vmax.f32 %v1561, %v1562
    %v1564 = vmax.f32 %v1538, %v1542
    %v1565 = vrot.slane %v1564, 4
    %v1566 = vmax.f32 %v1564, %v1565
    %v1567 = vrot.slane %v1566, 2
    %v1568 = vmax.f32 %v1566, %v1567
    %v1569 = vrot.slane %v1568, 1
    %v1570 = vmax.f32 %v1568, %v1569
    %vm1571 = vcmp.eq.f32.partialorder %v1535, %v1549
    %vm1572 = vcmp.eq.f32.partialorder %v1536, %v1556
    %vm1573 = vcmp.eq.f32.partialorder %v1537, %v1563
    %vm1574 = vcmp.eq.f32.partialorder %v1538, %v1570
    %vm1575 = vcmp.eq.f32.partialorder %v1539, %v1549
    %vm1576 = vcmp.eq.f32.partialorder %v1540, %v1556
    %vm1577 = vcmp.eq.f32.partialorder %v1541, %v1563
    %vm1578 = vcmp.eq.f32.partialorder %v1542, %v1570
    %v1579 = vsel %vm1571, %v43, 16
    %v1580 = vsel %vm1572, %v43, 16
    %v1581 = vsel %vm1573, %v43, 16
    %v1582 = vsel %vm1574, %v43, 16
    %v1583 = vsel %vm1575, %v44, 16
    %v1584 = vsel %vm1576, %v44, 16
    %v1585 = vsel %vm1577, %v44, 16
    %v1586 = vsel %vm1578, %v44, 16
    %vm1587 = vcmp.lt.s32.totalorder %v1579, %v1583
    %v1588 = vsel %vm1587, %v1579, %v1583
    %v1589 = vrot.slane %v1588, 4
    %vm1590 = vcmp.lt.s32.totalorder %v1588, %v1589
    %v1591 = vsel %vm1590, %v1588, %v1589
    %v1592 = vrot.slane %v1591, 2
    %vm1593 = vcmp.lt.s32.totalorder %v1591, %v1592
    %v1594 = vsel %vm1593, %v1591, %v1592
    %v1595 = vrot.slane %v1594, 1
    %vm1596 = vcmp.lt.s32.totalorder %v1594, %v1595
    %v1597 = vsel %vm1596, %v1594, %v1595
    %vm1598 = vcmp.lt.s32.totalorder %v1580, %v1584
    %v1599 = vsel %vm1598, %v1580, %v1584
    %v1600 = vrot.slane %v1599, 4
    %vm1601 = vcmp.lt.s32.totalorder %v1599, %v1600
    %v1602 = vsel %vm1601, %v1599, %v1600
    %v1603 = vrot.slane %v1602, 2
    %vm1604 = vcmp.lt.s32.totalorder %v1602, %v1603
    %v1605 = vsel %vm1604, %v1602, %v1603
    %v1606 = vrot.slane %v1605, 1
    %vm1607 = vcmp.lt.s32.totalorder %v1605, %v1606
    %v1608 = vsel %vm1607, %v1605, %v1606
    %vm1609 = vcmp.lt.s32.totalorder %v1581, %v1585
    %v1610 = vsel %vm1609, %v1581, %v1585
    %v1611 = vrot.slane %v1610, 4
    %vm1612 = vcmp.lt.s32.totalorder %v1610, %v1611
    %v1613 = vsel %vm1612, %v1610, %v1611
    %v1614 = vrot.slane %v1613, 2
    %vm1615 = vcmp.lt.s32.totalorder %v1613, %v1614
    %v1616 = vsel %vm1615, %v1613, %v1614
    %v1617 = vrot.slane %v1616, 1
    %vm1618 = vcmp.lt.s32.totalorder %v1616, %v1617
    %v1619 = vsel %vm1618, %v1616, %v1617
    %vm1620 = vcmp.lt.s32.totalorder %v1582, %v1586
    %v1621 = vsel %vm1620, %v1582, %v1586
    %v1622 = vrot.slane %v1621, 4
    %vm1623 = vcmp.lt.s32.totalorder %v1621, %v1622
    %v1624 = vsel %vm1623, %v1621, %v1622
    %v1625 = vrot.slane %v1624, 2
    %vm1626 = vcmp.lt.s32.totalorder %v1624, %v1625
    %v1627 = vsel %vm1626, %v1624, %v1625
    %v1628 = vrot.slane %v1627, 1
    %vm1629 = vcmp.lt.s32.totalorder %v1627, %v1628
    %v1630 = vsel %vm1629, %v1627, %v1628
    %v1631 = vcombine.low %v1597, %v1608
    %v1632 = vcombine.low %v1619, %v1630
    %v1634 = vunpack.c.l.s4 1983009808
    %v1635 = vunpack.c.0.s8 %v1634
    %v1636 = vlaneseq
    %v1637 = vshrl.u32 %v1636, 7
    %v1638 = vsub.s32 %v1635, %v1637
    %v1639 = vrot.slane %v1631, %v1638
    %v1641 = vunpack.c.l.s4 1983009808
    %v1642 = vunpack.c.0.s8 %v1641
    %v1643 = vlaneseq
    %v1644 = vshrl.u32 %v1643, 7
    %v1645 = vsub.s32 %v1642, %v1644
    %v1646 = vrot.slane %v1632, %v1645
    %v1647 = vcombine.low %v1639, %v1646
    %v1648 = vrot.slane %v1647, 7
    %vm1649 = vcmp.eq.s32.totalorder %v1534, %v1648
    %vm1650 = vcmp.eq.s32.totalorder %v1534, 3
    %v1651 = vsel %vm1650, %v1648, %v1534
    %v1652 = vsel %vm1649, 3, %v1651
    %v1654 = vunpack.c.l.s4 1966171168
    %v1655 = vunpack.c.0.s8 %v1654
    %v1656 = vlaneseq
    %v1657 = vshrl.u32 %v1656, 7
    %v1658 = vsub.s32 %v1655, %v1657
    %v1659 = vrot.slane %v1652, %v1658
    %v1660 = vcombine.high %v1659, %v1659
    %s1661 = scalar_lea.vmem [#allocation7], 1
    %1662 = vst.msk [vmem:[%s1661] ss:$2 sm:$0xf] %vm918, %v1660
    // Predicated region
    $region26: #{tpu_custom_call.1} parent=1 // pred_check
      _
    $region27: #{tpu_custom_call.1} parent=1 // pred_check_branch
      %1664 = sbr.rel (0) target = $region29
    $region28: #{tpu_custom_call.1} parent=1 // pred_region
      %s1666 = ssub.s32 128, 128
      %1667 = vsyncadd [#allocation4], %s1666
      %s1669 = sshll.u32 [#allocation7], 4
      %s1670 = int_to_ptr.vmem [resolvable:$true] %s1669
      %1672 = dma.vmem_to_hbm [thread:$0]  %s1670, 128, %s4, [#allocation4]
    $region29: #{tpu_custom_call.1} parent=1 // pred_fallthru
      _
    // Predicated region
    $region30: #{tpu_custom_call.1} parent=1 // pred_check
      _
    $region31: #{tpu_custom_call.1} parent=1 // pred_check_branch
      %1674 = sbr.rel (0) target = $region33
    $region32: #{tpu_custom_call.1} parent=1 // pred_region
      %1675 = dma.done [#allocation4], 128
    $region33: #{tpu_custom_call.1} parent=1 // pred_fallthru
      _
    %1676 = vsyncpa [#allocation3], 1
    %1677 = vsyncpa [#allocation6], 1
    %1678 = vsyncpa [#allocation4], 1

</llo_original>
